<compile_context>
chip_gen: v7x
topology: tpu7x:2x2x1
jax: 0.10.0
libtpu: 0.0.40
codegen_flags: <defaults>
</compile_context>

<pallas_src>
import functools
import math

import jax
import jax.numpy as jnp
import numpy as np
from jax import lax
from jax.experimental import pallas as pl
from jax.experimental.pallas import tpu as pltpu

# ---------------- configuration (all-scalar irreps) ----------------
C_IN, C_ATTR, C_EDGE, C_OUT = 8, 4, 4, 8
C_MID = C_IN                          # irreps_mid = "8x0e" from the single 'uvu' path
FC_NEURONS = [16, 32]                 # fc_neurons (input + hidden widths)
WEIGHT_NUMEL = C_IN * C_EDGE          # per-edge tp weights: (u, v) = (8, 4) -> 32
NUM_NEIGHBORS = 3.0


def _round_up(x, m):
    return ((x + m - 1) // m) * m


# ---------------- host-precomputed 0/1 expansion matrices ----------------
def _rep_mat(a_dim, b_dim):
    # (x @ M)[n, a*b_dim + b] == x[n, a]
    m = np.zeros((a_dim, a_dim * b_dim), np.float32)
    for a in range(a_dim):
        m[a, a * b_dim:(a + 1) * b_dim] = 1.0
    return jnp.asarray(m)


def _tile_mat(b_dim, a_dim):
    # (v @ M)[n, a*b_dim + b] == v[n, b]
    m = np.zeros((b_dim, a_dim * b_dim), np.float32)
    for a in range(a_dim):
        for b in range(b_dim):
            m[b, a * b_dim + b] = 1.0
    return jnp.asarray(m)


def _sum_v_mat(u_dim, v_dim):
    # (y @ M)[n, u] == sum_v y[n, u*v_dim + v]
    m = np.zeros((u_dim * v_dim, u_dim), np.float32)
    for u in range(u_dim):
        m[u * v_dim:(u + 1) * v_dim, u] = 1.0
    return jnp.asarray(m)


# ---------------- fused Pallas kernel ----------------
def _conv_fused_kernel(
        # scalar-prefetch refs (SMEM)
        src_ref, dst_ref,
        # VMEM inputs
        x_ref, attr_ref, mask_ref, ea_ref, emb_ref,
        w_fc1_ref, w_fc2_ref, w_sc_lin1_ref, w_lin2_ref,
        r_in_ref, t_attr_ref, t_edge_ref, s_uv_ref,
        # output
        out_ref,
        # VMEM scratch
        s_scr, x1_scr, attr_tile_scr, x_mid_scr, feats_scr,
        *, tile_e, norm_in, norm_mid, tp_norm, scatter_scale,
        c_s, c_x, use_bf16):
    """Whole Convolution forward; grid axis 0 tiles the edge (reduction) dim.

    step 0          : sc + lin1 fused FCTP on nodes -> s, x1 scratch; zero x_mid
    every edge step : FCNet(emb tile) -> tp weights; 'uvu' tensor product;
                      index-based gather x1[edge_src] * feats, scatter-add into
                      x_mid accumulator (O(E) work, no one-hot matrices)
    last step       : x_mid / sqrt(num_neighbors); lin2 FCTP; sin/cos/mask combine
    """
    f32 = jnp.float32
    cdt = jnp.bfloat16 if use_bf16 else jnp.float32

    def mm(a, b):
        # MXU matmul; optionally bf16 operands (v6e/v7x), always f32 accumulation.
        return jnp.dot(a.astype(cdt), b.astype(cdt), preferred_element_type=f32)

    e_step = pl.program_id(0)
    n_steps = pl.num_programs(0)

    # ---- step 0: node-side FCTP (sc + lin1 fused) and accumulator init ----
    @pl.when(e_step == 0)
    def _init():
        attr_tile = mm(attr_ref[...], t_attr_ref[...])                # [N, A*B]
        outer = mm(x_ref[...], r_in_ref[...]) * attr_tile             # [N, A*B]
        sc_lin1 = mm(outer, w_sc_lin1_ref[...]) * norm_in             # [N, C_OUT+C_IN]
        s_scr[...] = sc_lin1[:, :C_OUT]
        x1_scr[...] = sc_lin1[:, C_OUT:]
        attr_tile_scr[...] = attr_tile                                # reused by lin2
        x_mid_scr[...] = jnp.zeros_like(x_mid_scr)

    # ---- every step: FC net + 'uvu' tensor product on this edge tile ----
    h = mm(emb_ref[...], w_fc1_ref[...]) * (1.0 / math.sqrt(w_fc1_ref.shape[0]))
    h = h * jax.nn.sigmoid(h)                                         # silu, f32 VPU/EUP
    w_edge = mm(h, w_fc2_ref[...]) * (1.0 / math.sqrt(w_fc2_ref.shape[0]))  # [TE, U*V]
    wea = w_edge * mm(ea_ref[...], t_edge_ref[...])                   # [TE, U*V]
    feats_scr[...] = mm(wea, s_uv_ref[...]) * tp_norm                 # [TE, U], xs applied below

    # ---- O(E) index-based gather (x1[edge_src]) + scatter-add into x_mid ----
    base = e_step * tile_e

    def _edge_body(i, carry):
        src = src_ref[base + i]                                       # SMEM scalar read
        dst = dst_ref[base + i]
        contrib = x1_scr[pl.ds(src, 1), :] * feats_scr[pl.ds(i, 1), :]
        x_mid_scr[pl.ds(dst, 1), :] = x_mid_scr[pl.ds(dst, 1), :] + contrib
        return carry

    lax.fori_loop(0, tile_e, _edge_body, 0)

    # ---- last step: lin2 FCTP + sin/cos/mask combine ----
    @pl.when(e_step == n_steps - 1)
    def _final():
        x_mid = x_mid_scr[...] * scatter_scale                        # /sqrt(num_neighbors)
        outer2 = mm(x_mid, r_in_ref[...]) * attr_tile_scr[...]
        x2 = mm(outer2, w_lin2_ref[...]) * norm_mid
        m = mask_ref[...]
        out_ref[...] = (c_s * s_scr[...] + (1.0 - m + c_x * m) * x2).astype(out_ref.dtype)

    # TODO(synk): for production graphs, flip the edge-tile compute to channels-first
    # ([C, E_tile] with edges on lanes), emit the output transposed/lane-dense, and add
    # a parallel node-tile grid axis (dimension_semantics "parallel") for v7x's 2 TCs.


# ---------------- module wrapper ----------------
class ConvolutionPallas:
    def __init__(self, key):
        k = jax.random.split(key, 5)
        # 3D weights kept for the pure-JAX reference
        self.w_sc = jax.random.normal(k[0], (C_IN, C_ATTR, C_OUT), jnp.float32)
        self.w_lin1 = jax.random.normal(k[1], (C_IN, C_ATTR, C_IN), jnp.float32)
        self.w_lin2 = jax.random.normal(k[2], (C_MID, C_ATTR, C_OUT), jnp.float32)
        self.w_fc1 = jax.random.normal(k[3], (FC_NEURONS[0], FC_NEURONS[1]), jnp.float32)
        self.w_fc2 = jax.random.normal(k[4], (FC_NEURONS[1], WEIGHT_NUMEL), jnp.float32)
        # sc.output_mask: every 0e output irrep has a path -> all ones
        self.output_mask = jnp.ones((1, C_OUT), jnp.float32)

        # kernel-side weights: flatten (a, b, c) -> (a*b, c), b fastest (matches the
        # in-kernel outer-product layout); sc + lin1 fused into one matrix.
        self.w_sc_lin1_flat = jnp.concatenate(
            [self.w_sc.reshape(C_IN * C_ATTR, C_OUT),
             self.w_lin1.reshape(C_IN * C_ATTR, C_IN)], axis=1)        # [32, 16]
        self.w_lin2_flat = self.w_lin2.reshape(C_MID * C_ATTR, C_OUT)  # [32, 8]

        # host-precomputed 0/1 expansion matrices (VMEM-resident, never rebuilt per step)
        self.R_in = _rep_mat(C_IN, C_ATTR)       # [8, 32]
        self.T_attr = _tile_mat(C_ATTR, C_IN)    # [4, 32]
        self.T_edge = _tile_mat(C_EDGE, C_IN)    # [4, 32]
        self.S_uv = _sum_v_mat(C_IN, C_EDGE)     # [32, 8]

    def __call__(self, node_input, node_attr, edge_src, edge_dst,
                 edge_attr, edge_length_embedded, *, tile_e=256, use_bf16=False):
        N = node_input.shape[0]
        E = edge_attr.shape[0]
        fc_in = edge_length_embedded.shape[1]

        # edge-tile size: multiple of 8 sublanes; pad E up to a whole number of tiles
        tile_e = _round_up(min(tile_e, _round_up(E, 8)), 8)
        e_pad = _round_up(E, tile_e)
        n_steps = e_pad // tile_e
        pad = e_pad - E

        src = edge_src.astype(jnp.int32)
        dst = edge_dst.astype(jnp.int32)
        ea = edge_attr
        emb = edge_length_embedded
        if pad:
            # padded edges carry edge_attr == 0 -> zero contribution; indices point at node 0
            src = jnp.pad(src, (0, pad))
            dst = jnp.pad(dst, (0, pad))
            ea = jnp.pad(ea, ((0, pad), (0, 0)))
            emb = jnp.pad(emb, ((0, pad), (0, 0)))

        kernel = functools.partial(
            _conv_fused_kernel,
            tile_e=tile_e,
            norm_in=1.0 / math.sqrt(C_IN * C_ATTR),
            norm_mid=1.0 / math.sqrt(C_MID * C_ATTR),
            tp_norm=1.0 / math.sqrt(C_EDGE),
            scatter_scale=1.0 / math.sqrt(NUM_NEIGHBORS),
            c_s=math.sin(math.pi / 8),
            c_x=math.cos(math.pi / 8),
            use_bf16=use_bf16,
        )

        resident = lambda e, src_p, dst_p: (0, 0)     # same block every step -> stays in VMEM
        edge_tiled = lambda e, src_p, dst_p: (e, 0)   # streamed, pipelined by Pallas
        # (pipeline depth can be raised with pipeline_mode=pl.Buffered(3) on the edge specs)

        grid_spec = pltpu.PrefetchScalarGridSpec(
            num_scalar_prefetch=2,                    # edge_src, edge_dst -> SMEM
            grid=(n_steps,),                          # edge tiles = reduction axis
            in_specs=[
                pl.BlockSpec((N, C_IN), resident),            # node_input
                pl.BlockSpec((N, C_ATTR), resident),          # node_attr
                pl.BlockSpec((1, C_OUT), resident),           # output mask
                pl.BlockSpec((tile_e, C_EDGE), edge_tiled),   # edge_attr tile
                pl.BlockSpec((tile_e, fc_in), edge_tiled),    # edge_length_embedded tile
                pl.BlockSpec((FC_NEURONS[0], FC_NEURONS[1]), resident),   # w_fc1
                pl.BlockSpec((FC_NEURONS[1], WEIGHT_NUMEL), resident),    # w_fc2
                pl.BlockSpec((C_IN * C_ATTR, C_OUT + C_IN), resident),    # w_sc | w_lin1
                pl.BlockSpec((C_MID * C_ATTR, C_OUT), resident),          # w_lin2
                pl.BlockSpec((C_IN, C_IN * C_ATTR), resident),            # R_in
                pl.BlockSpec((C_ATTR, C_IN * C_ATTR), resident),          # T_attr
                pl.BlockSpec((C_EDGE, C_IN * C_EDGE), resident),          # T_edge
                pl.BlockSpec((C_IN * C_EDGE, C_IN), resident),            # S_uv
            ],
            out_specs=pl.BlockSpec((N, C_OUT), resident),
            scratch_shapes=[
                pltpu.VMEM((N, C_OUT), jnp.float32),           # s
                pltpu.VMEM((N, C_IN), jnp.float32),            # x1
                pltpu.VMEM((N, C_IN * C_ATTR), jnp.float32),   # attr_tile (reused by lin2)
                pltpu.VMEM((N, C_MID), jnp.float32),           # x_mid accumulator
                pltpu.VMEM((tile_e, C_MID), jnp.float32),      # per-tile edge features
            ],
        )

        return pl.pallas_call(
            kernel,
            grid_spec=grid_spec,
            out_shape=jax.ShapeDtypeStruct((N, C_OUT), jnp.float32),
            compiler_params=pltpu.CompilerParams(
                dimension_semantics=("arbitrary",),    # edge axis is a reduction
                vmem_limit_bytes=32 * 1024 * 1024,     # explicit; safe on v5e/v6e/v7x
            ),
        )(src, dst,
          node_input, node_attr, self.output_mask, ea, emb,
          self.w_fc1, self.w_fc2, self.w_sc_lin1_flat, self.w_lin2_flat,
          self.R_in, self.T_attr, self.T_edge, self.S_uv)


# ---------------- pure-JAX reference for validation ----------------
def reference(conv, node_input, node_attr, edge_src, edge_dst, edge_attr, emb):
    h = emb @ conv.w_fc1 / math.sqrt(FC_NEURONS[0])
    h = h * jax.nn.sigmoid(h)
    weight = h @ conv.w_fc2 / math.sqrt(FC_NEURONS[1])
    norm_in = 1.0 / math.sqrt(C_IN * C_ATTR)
    s = jnp.einsum('na,nb,abc->nc', node_input, node_attr, conv.w_sc) * norm_in
    x1 = jnp.einsum('na,nb,abc->nc', node_input, node_attr, conv.w_lin1) * norm_in
    xs = x1[edge_src]
    w = weight.reshape(-1, C_IN, C_EDGE)
    feats = jnp.einsum('euv,eu,ev->eu', w, xs, edge_attr) / math.sqrt(C_EDGE)
    xm = jnp.zeros((node_input.shape[0], C_MID), jnp.float32
                   ).at[edge_dst].add(feats) / math.sqrt(NUM_NEIGHBORS)
    x2 = jnp.einsum('na,nb,abc->nc', xm, node_attr, conv.w_lin2) / math.sqrt(C_MID * C_ATTR)
    c_s, c_x = math.sin(math.pi / 8), math.cos(math.pi / 8)
    m = conv.output_mask
    return c_s * s + (1.0 - m + c_x * m) * x2


if __name__ == "__main__":
    key = jax.random.PRNGKey(0)
    k_in, k_attr, k_edge, k_emb, k_src, k_dst, k_par = jax.random.split(key, 7)

    N, E = 8, 16
    node_input = jax.random.normal(k_in, (N, C_IN), jnp.float32)
    node_attr = jax.random.normal(k_attr, (N, C_ATTR), jnp.float32)
    edge_attr = jax.random.normal(k_edge, (E, C_EDGE), jnp.float32)
    edge_length_embedded = jax.random.normal(k_emb, (E, FC_NEURONS[0]), jnp.float32)
    edge_src = jax.random.randint(k_src, (E,), 0, N, jnp.int32)
    edge_dst = jax.random.randint(k_dst, (E,), 0, N, jnp.int32)

    conv = ConvolutionPallas(k_par)
    # tile_e=8 -> 2 edge-tile grid steps, exercising the accumulator / pl.when paths
    out = conv(node_input, node_attr, edge_src, edge_dst,
               edge_attr, edge_length_embedded, tile_e=8)
    out = jax.block_until_ready(out)

    ref = reference(conv, node_input, node_attr, edge_src, edge_dst,
                    edge_attr, edge_length_embedded)
    np.testing.assert_allclose(np.asarray(out), np.asarray(ref),
                               rtol=1e-4, atol=1e-4)
    print("KERNEL_OK")
</pallas_src>

<mosaic_0001>
module attributes {stable_mosaic.version = 11 : i64} {
  func.func @_conv_fused_kernel(%arg0: i32, %arg1: memref<16xi32, #tpu.memory_space<smem>>, %arg2: memref<16xi32, #tpu.memory_space<smem>>, %arg3: memref<8x8xf32, #tpu.memory_space<vmem>>, %arg4: memref<8x4xf32, #tpu.memory_space<vmem>>, %arg5: memref<1x8xf32, #tpu.memory_space<vmem>>, %arg6: memref<8x4xf32, #tpu.memory_space<vmem>>, %arg7: memref<8x16xf32, #tpu.memory_space<vmem>>, %arg8: memref<16x32xf32, #tpu.memory_space<vmem>>, %arg9: memref<32x32xf32, #tpu.memory_space<vmem>>, %arg10: memref<32x16xf32, #tpu.memory_space<vmem>>, %arg11: memref<32x8xf32, #tpu.memory_space<vmem>>, %arg12: memref<8x32xf32, #tpu.memory_space<vmem>>, %arg13: memref<4x32xf32, #tpu.memory_space<vmem>>, %arg14: memref<4x32xf32, #tpu.memory_space<vmem>>, %arg15: memref<32x8xf32, #tpu.memory_space<vmem>>, %arg16: memref<8x8xf32, #tpu.memory_space<vmem>>, %arg17: memref<8x8xf32, #tpu.memory_space<vmem>>, %arg18: memref<8x8xf32, #tpu.memory_space<vmem>>, %arg19: memref<8x32xf32, #tpu.memory_space<vmem>>, %arg20: memref<8x8xf32, #tpu.memory_space<vmem>>, %arg21: memref<8x8xf32, #tpu.memory_space<vmem>>) attributes {dimension_semantics = [#tpu.dimension_semantics<arbitrary>], iteration_bounds = array<i64: 2>, scalar_prefetch = 2 : i64, scratch_operands = 5 : i64, tpu.core_type = #tpu.core_type<tc>, window_params = [{pipeline_mode = #tpu.pipeline_mode<synchronous>, transform_indices = @transform_0, window_bounds = array<i64: 8, 8>}, {pipeline_mode = #tpu.pipeline_mode<synchronous>, transform_indices = @transform_1, window_bounds = array<i64: 8, 4>}, {pipeline_mode = #tpu.pipeline_mode<synchronous>, transform_indices = @transform_2, window_bounds = array<i64: 1, 8>}, {transform_indices = @transform_3, window_bounds = array<i64: 8, 4>}, {transform_indices = @transform_4, window_bounds = array<i64: 8, 16>}, {pipeline_mode = #tpu.pipeline_mode<synchronous>, transform_indices = @transform_5, window_bounds = array<i64: 16, 32>}, {pipeline_mode = #tpu.pipeline_mode<synchronous>, transform_indices = @transform_6, window_bounds = array<i64: 32, 32>}, {pipeline_mode = #tpu.pipeline_mode<synchronous>, transform_indices = @transform_7, window_bounds = array<i64: 32, 16>}, {pipeline_mode = #tpu.pipeline_mode<synchronous>, transform_indices = @transform_8, window_bounds = array<i64: 32, 8>}, {pipeline_mode = #tpu.pipeline_mode<synchronous>, transform_indices = @transform_9, window_bounds = array<i64: 8, 32>}, {pipeline_mode = #tpu.pipeline_mode<synchronous>, transform_indices = @transform_10, window_bounds = array<i64: 4, 32>}, {pipeline_mode = #tpu.pipeline_mode<synchronous>, transform_indices = @transform_11, window_bounds = array<i64: 4, 32>}, {pipeline_mode = #tpu.pipeline_mode<synchronous>, transform_indices = @transform_12, window_bounds = array<i64: 32, 8>}, {pipeline_mode = #tpu.pipeline_mode<synchronous>, transform_indices = @transform_13, window_bounds = array<i64: 8, 8>}]} {
    %c0_i32 = arith.constant 0 : i32
    %0 = arith.cmpi eq, %arg0, %c0_i32 : i32
    %1 = arith.extui %0 : i1 to i32
    %c0_i32_0 = arith.constant 0 : i32
    %2 = arith.cmpi ne, %1, %c0_i32_0 : i32
    scf.if %2 {
      %c0_26 = arith.constant 0 : index
      %c0_27 = arith.constant 0 : index
      %32 = vector.load %arg4[%c0_26, %c0_27] : memref<8x4xf32, #tpu.memory_space<vmem>>, vector<8x4xf32>
      %c0_28 = arith.constant 0 : index
      %c0_29 = arith.constant 0 : index
      %33 = vector.load %arg13[%c0_28, %c0_29] : memref<4x32xf32, #tpu.memory_space<vmem>>, vector<4x32xf32>
      %cst_30 = arith.constant dense<0.000000e+00> : vector<8x32xf32>
      %34 = tpu.matmul %32, %33, %cst_30 {dimension_numbers = #tpu.dot_dimension_numbers<[1], [0], [0], [1], [0, 0, 1, 1], [], []>} : vector<8x4xf32>, vector<4x32xf32>, vector<8x32xf32> -> vector<8x32xf32>
      %c0_31 = arith.constant 0 : index
      %c0_32 = arith.constant 0 : index
      %35 = vector.load %arg3[%c0_31, %c0_32] : memref<8x8xf32, #tpu.memory_space<vmem>>, vector<8x8xf32>
      %c0_33 = arith.constant 0 : index
      %c0_34 = arith.constant 0 : index
      %36 = vector.load %arg12[%c0_33, %c0_34] : memref<8x32xf32, #tpu.memory_space<vmem>>, vector<8x32xf32>
      %cst_35 = arith.constant dense<0.000000e+00> : vector<8x32xf32>
      %37 = tpu.matmul %35, %36, %cst_35 {dimension_numbers = #tpu.dot_dimension_numbers<[1], [0], [0], [1], [0, 0, 1, 1], [], []>} : vector<8x8xf32>, vector<8x32xf32>, vector<8x32xf32> -> vector<8x32xf32>
      %38 = arith.mulf %37, %34 : vector<8x32xf32>
      %c0_36 = arith.constant 0 : index
      %c0_37 = arith.constant 0 : index
      %39 = vector.load %arg10[%c0_36, %c0_37] : memref<32x16xf32, #tpu.memory_space<vmem>>, vector<32x16xf32>
      %cst_38 = arith.constant dense<0.000000e+00> : vector<8x16xf32>
      %40 = tpu.matmul %38, %39, %cst_38 {dimension_numbers = #tpu.dot_dimension_numbers<[1], [0], [0], [1], [0, 0, 1, 1], [], []>} : vector<8x32xf32>, vector<32x16xf32>, vector<8x16xf32> -> vector<8x16xf32>
      %cst_39 = arith.constant 0.176776692 : f32
      %41 = vector.broadcast %cst_39 : f32 to vector<8x16xf32>
      %42 = arith.mulf %40, %41 : vector<8x16xf32>
      %43 = vector.extract_strided_slice %42 {offsets = [0, 0], sizes = [8, 8], strides = [1, 1]} : vector<8x16xf32> to vector<8x8xf32>
      %c0_40 = arith.constant 0 : index
      %c0_41 = arith.constant 0 : index
      %44 = vector.load %arg17[%c0_40, %c0_41] : memref<8x8xf32, #tpu.memory_space<vmem>>, vector<8x8xf32>
      tpu.vector_store %arg17[%c0_40, %c0_41], %43 {strides = array<i32>} : memref<8x8xf32, #tpu.memory_space<vmem>>, vector<8x8xf32>,
      %45 = vector.extract_strided_slice %42 {offsets = [0, 8], sizes = [8, 8], strides = [1, 1]} : vector<8x16xf32> to vector<8x8xf32>
      %c0_42 = arith.constant 0 : index
      %c0_43 = arith.constant 0 : index
      %46 = vector.load %arg18[%c0_42, %c0_43] : memref<8x8xf32, #tpu.memory_space<vmem>>, vector<8x8xf32>
      tpu.vector_store %arg18[%c0_42, %c0_43], %45 {strides = array<i32>} : memref<8x8xf32, #tpu.memory_space<vmem>>, vector<8x8xf32>,
      %c0_44 = arith.constant 0 : index
      %c0_45 = arith.constant 0 : index
      %47 = vector.load %arg19[%c0_44, %c0_45] : memref<8x32xf32, #tpu.memory_space<vmem>>, vector<8x32xf32>
      tpu.vector_store %arg19[%c0_44, %c0_45], %34 {strides = array<i32>} : memref<8x32xf32, #tpu.memory_space<vmem>>, vector<8x32xf32>,
      %cst_46 = arith.constant 0.000000e+00 : f32
      %48 = vector.broadcast %cst_46 : f32 to vector<8x8xf32>
      %c0_47 = arith.constant 0 : index
      %c0_48 = arith.constant 0 : index
      %49 = vector.load %arg20[%c0_47, %c0_48] : memref<8x8xf32, #tpu.memory_space<vmem>>, vector<8x8xf32>
      tpu.vector_store %arg20[%c0_47, %c0_48], %48 {strides = array<i32>} : memref<8x8xf32, #tpu.memory_space<vmem>>, vector<8x8xf32>,
    } else {
    }
    %c0 = arith.constant 0 : index
    %c0_1 = arith.constant 0 : index
    %3 = vector.load %arg7[%c0, %c0_1] : memref<8x16xf32, #tpu.memory_space<vmem>>, vector<8x16xf32>
    %c0_2 = arith.constant 0 : index
    %c0_3 = arith.constant 0 : index
    %4 = vector.load %arg8[%c0_2, %c0_3] : memref<16x32xf32, #tpu.memory_space<vmem>>, vector<16x32xf32>
    %cst = arith.constant dense<0.000000e+00> : vector<8x32xf32>
    %5 = tpu.matmul %3, %4, %cst {dimension_numbers = #tpu.dot_dimension_numbers<[1], [0], [0], [1], [0, 0, 1, 1], [], []>} : vector<8x16xf32>, vector<16x32xf32>, vector<8x32xf32> -> vector<8x32xf32>
    %cst_4 = arith.constant 2.500000e-01 : f32
    %6 = vector.broadcast %cst_4 : f32 to vector<8x32xf32>
    %7 = arith.mulf %5, %6 : vector<8x32xf32>
    %8 = arith.negf %7 : vector<8x32xf32>
    %9 = math.exp %8 : vector<8x32xf32>
    %cst_5 = arith.constant 1.000000e+00 : f32
    %10 = vector.broadcast %cst_5 : f32 to vector<8x32xf32>
    %11 = arith.addf %10, %9 : vector<8x32xf32>
    %12 = arith.divf %10, %11 : vector<8x32xf32>
    %13 = arith.mulf %7, %12 : vector<8x32xf32>
    %c0_6 = arith.constant 0 : index
    %c0_7 = arith.constant 0 : index
    %14 = vector.load %arg9[%c0_6, %c0_7] : memref<32x32xf32, #tpu.memory_space<vmem>>, vector<32x32xf32>
    %cst_8 = arith.constant dense<0.000000e+00> : vector<8x32xf32>
    %15 = tpu.matmul %13, %14, %cst_8 {dimension_numbers = #tpu.dot_dimension_numbers<[1], [0], [0], [1], [0, 0, 1, 1], [], []>} : vector<8x32xf32>, vector<32x32xf32>, vector<8x32xf32> -> vector<8x32xf32>
    %cst_9 = arith.constant 0.176776692 : f32
    %16 = vector.broadcast %cst_9 : f32 to vector<8x32xf32>
    %17 = arith.mulf %15, %16 : vector<8x32xf32>
    %c0_10 = arith.constant 0 : index
    %c0_11 = arith.constant 0 : index
    %18 = vector.load %arg6[%c0_10, %c0_11] : memref<8x4xf32, #tpu.memory_space<vmem>>, vector<8x4xf32>
    %c0_12 = arith.constant 0 : index
    %c0_13 = arith.constant 0 : index
    %19 = vector.load %arg14[%c0_12, %c0_13] : memref<4x32xf32, #tpu.memory_space<vmem>>, vector<4x32xf32>
    %cst_14 = arith.constant dense<0.000000e+00> : vector<8x32xf32>
    %20 = tpu.matmul %18, %19, %cst_14 {dimension_numbers = #tpu.dot_dimension_numbers<[1], [0], [0], [1], [0, 0, 1, 1], [], []>} : vector<8x4xf32>, vector<4x32xf32>, vector<8x32xf32> -> vector<8x32xf32>
    %21 = arith.mulf %17, %20 : vector<8x32xf32>
    %c0_15 = arith.constant 0 : index
    %c0_16 = arith.constant 0 : index
    %22 = vector.load %arg15[%c0_15, %c0_16] : memref<32x8xf32, #tpu.memory_space<vmem>>, vector<32x8xf32>
    %cst_17 = arith.constant dense<0.000000e+00> : vector<8x8xf32>
    %23 = tpu.matmul %21, %22, %cst_17 {dimension_numbers = #tpu.dot_dimension_numbers<[1], [0], [0], [1], [0, 0, 1, 1], [], []>} : vector<8x32xf32>, vector<32x8xf32>, vector<8x8xf32> -> vector<8x8xf32>
    %cst_18 = arith.constant 5.000000e-01 : f32
    %24 = vector.broadcast %cst_18 : f32 to vector<8x8xf32>
    %25 = arith.mulf %23, %24 : vector<8x8xf32>
    %c0_19 = arith.constant 0 : index
    %c0_20 = arith.constant 0 : index
    %26 = vector.load %arg21[%c0_19, %c0_20] : memref<8x8xf32, #tpu.memory_space<vmem>>, vector<8x8xf32>
    tpu.vector_store %arg21[%c0_19, %c0_20], %25 {strides = array<i32>} : memref<8x8xf32, #tpu.memory_space<vmem>>, vector<8x8xf32>,
    %c8_i32 = arith.constant 8 : i32
    %27 = arith.muli %arg0, %c8_i32 : i32
    %c0_i32_21 = arith.constant 0 : i32
    %c8_i32_22 = arith.constant 8 : i32
    %28 = arith.addi %c0_i32_21, %c8_i32_22 : i32
    %c1_i32 = arith.constant 1 : i32
    scf.for %arg22 = %c0_i32_21 to %28 step %c1_i32  : i32 {
      %32 = arith.addi %27, %arg22 : i32
      %33 = arith.index_cast %32 : i32 to index
      %34 = memref.load %arg1[%33] : memref<16xi32, #tpu.memory_space<smem>>
      %35 = arith.addi %27, %arg22 : i32
      %36 = arith.index_cast %35 : i32 to index
      %37 = memref.load %arg2[%36] : memref<16xi32, #tpu.memory_space<smem>>
      %38 = arith.index_cast %34 : i32 to index
      %c0_26 = arith.constant 0 : index
      %39 = vector.load %arg18[%38, %c0_26] : memref<8x8xf32, #tpu.memory_space<vmem>>, vector<1x8xf32>
      %40 = arith.index_cast %arg22 : i32 to index
      %c0_27 = arith.constant 0 : index
      %41 = vector.load %arg21[%40, %c0_27] : memref<8x8xf32, #tpu.memory_space<vmem>>, vector<1x8xf32>
      %42 = arith.mulf %39, %41 : vector<1x8xf32>
      %43 = arith.index_cast %37 : i32 to index
      %c0_28 = arith.constant 0 : index
      %44 = vector.load %arg20[%43, %c0_28] : memref<8x8xf32, #tpu.memory_space<vmem>>, vector<1x8xf32>
      %45 = arith.addf %44, %42 : vector<1x8xf32>
      %46 = arith.index_cast %37 : i32 to index
      %c0_29 = arith.constant 0 : index
      %47 = vector.load %arg20[%46, %c0_29] : memref<8x8xf32, #tpu.memory_space<vmem>>, vector<1x8xf32>
      tpu.vector_store %arg20[%46, %c0_29], %45 {strides = array<i32>} : memref<8x8xf32, #tpu.memory_space<vmem>>, vector<1x8xf32>,
    }
    %c8_i32_23 = arith.constant 8 : i32
    %c1_i32_24 = arith.constant 1 : i32
    %29 = arith.cmpi eq, %arg0, %c1_i32_24 : i32
    %30 = arith.extui %29 : i1 to i32
    %c0_i32_25 = arith.constant 0 : i32
    %31 = arith.cmpi ne, %30, %c0_i32_25 : i32
    scf.if %31 {
      %c0_26 = arith.constant 0 : index
      %c0_27 = arith.constant 0 : index
      %32 = vector.load %arg20[%c0_26, %c0_27] : memref<8x8xf32, #tpu.memory_space<vmem>>, vector<8x8xf32>
      %cst_28 = arith.constant 0.577350259 : f32
      %33 = vector.broadcast %cst_28 : f32 to vector<8x8xf32>
      %34 = arith.mulf %32, %33 : vector<8x8xf32>
      %c0_29 = arith.constant 0 : index
      %c0_30 = arith.constant 0 : index
      %35 = vector.load %arg12[%c0_29, %c0_30] : memref<8x32xf32, #tpu.memory_space<vmem>>, vector<8x32xf32>
      %cst_31 = arith.constant dense<0.000000e+00> : vector<8x32xf32>
      %36 = tpu.matmul %34, %35, %cst_31 {dimension_numbers = #tpu.dot_dimension_numbers<[1], [0], [0], [1], [0, 0, 1, 1], [], []>} : vector<8x8xf32>, vector<8x32xf32>, vector<8x32xf32> -> vector<8x32xf32>
      %c0_32 = arith.constant 0 : index
      %c0_33 = arith.constant 0 : index
      %37 = vector.load %arg19[%c0_32, %c0_33] : memref<8x32xf32, #tpu.memory_space<vmem>>, vector<8x32xf32>
      %38 = arith.mulf %36, %37 : vector<8x32xf32>
      %c0_34 = arith.constant 0 : index
      %c0_35 = arith.constant 0 : index
      %39 = vector.load %arg11[%c0_34, %c0_35] : memref<32x8xf32, #tpu.memory_space<vmem>>, vector<32x8xf32>
      %cst_36 = arith.constant dense<0.000000e+00> : vector<8x8xf32>
      %40 = tpu.matmul %38, %39, %cst_36 {dimension_numbers = #tpu.dot_dimension_numbers<[1], [0], [0], [1], [0, 0, 1, 1], [], []>} : vector<8x32xf32>, vector<32x8xf32>, vector<8x8xf32> -> vector<8x8xf32>
      %cst_37 = arith.constant 0.176776692 : f32
      %41 = vector.broadcast %cst_37 : f32 to vector<8x8xf32>
      %42 = arith.mulf %40, %41 : vector<8x8xf32>
      %c0_38 = arith.constant 0 : index
      %c0_39 = arith.constant 0 : index
      %43 = vector.load %arg5[%c0_38, %c0_39] : memref<1x8xf32, #tpu.memory_space<vmem>>, vector<1x8xf32>
      %c0_40 = arith.constant 0 : index
      %c0_41 = arith.constant 0 : index
      %44 = vector.load %arg17[%c0_40, %c0_41] : memref<8x8xf32, #tpu.memory_space<vmem>>, vector<8x8xf32>
      %cst_42 = arith.constant 0.382683426 : f32
      %45 = vector.broadcast %cst_42 : f32 to vector<8x8xf32>
      %46 = arith.mulf %45, %44 : vector<8x8xf32>
      %cst_43 = arith.constant 1.000000e+00 : f32
      %47 = vector.broadcast %cst_43 : f32 to vector<1x8xf32>
      %48 = arith.subf %47, %43 : vector<1x8xf32>
      %cst_44 = arith.constant 0.923879504 : f32
      %49 = vector.broadcast %cst_44 : f32 to vector<1x8xf32>
      %50 = arith.mulf %49, %43 : vector<1x8xf32>
      %51 = arith.addf %48, %50 : vector<1x8xf32>
      %52 = vector.broadcast %51 : vector<1x8xf32> to vector<8x8xf32>
      %53 = arith.mulf %52, %42 : vector<8x8xf32>
      %54 = arith.addf %46, %53 : vector<8x8xf32>
      %c0_45 = arith.constant 0 : index
      %c0_46 = arith.constant 0 : index
      %55 = vector.load %arg16[%c0_45, %c0_46] : memref<8x8xf32, #tpu.memory_space<vmem>>, vector<8x8xf32>
      tpu.vector_store %arg16[%c0_45, %c0_46], %54 {strides = array<i32>} : memref<8x8xf32, #tpu.memory_space<vmem>>, vector<8x8xf32>,
    } else {
    }
    return
  }
  func.func @transform_0(%arg0: i32, %arg1: memref<16xi32, #tpu.memory_space<smem>>, %arg2: memref<16xi32, #tpu.memory_space<smem>>) -> (i32, i32) {
    %c0_i32 = arith.constant 0 : i32
    %c0_i32_0 = arith.constant 0 : i32
    %c0_i32_1 = arith.constant 0 : i32
    return %c0_i32, %c0_i32_0 : i32, i32
  }
  func.func @transform_1(%arg0: i32, %arg1: memref<16xi32, #tpu.memory_space<smem>>, %arg2: memref<16xi32, #tpu.memory_space<smem>>) -> (i32, i32) {
    %c0_i32 = arith.constant 0 : i32
    %c0_i32_0 = arith.constant 0 : i32
    %c0_i32_1 = arith.constant 0 : i32
    return %c0_i32, %c0_i32_0 : i32, i32
  }
  func.func @transform_2(%arg0: i32, %arg1: memref<16xi32, #tpu.memory_space<smem>>, %arg2: memref<16xi32, #tpu.memory_space<smem>>) -> (i32, i32) {
    %c0_i32 = arith.constant 0 : i32
    %c0_i32_0 = arith.constant 0 : i32
    %c0_i32_1 = arith.constant 0 : i32
    return %c0_i32, %c0_i32_0 : i32, i32
  }
  func.func @transform_3(%arg0: i32, %arg1: memref<16xi32, #tpu.memory_space<smem>>, %arg2: memref<16xi32, #tpu.memory_space<smem>>) -> (i32, i32) {
    %c0_i32 = arith.constant 0 : i32
    %c0_i32_0 = arith.constant 0 : i32
    return %arg0, %c0_i32 : i32, i32
  }
  func.func @transform_4(%arg0: i32, %arg1: memref<16xi32, #tpu.memory_space<smem>>, %arg2: memref<16xi32, #tpu.memory_space<smem>>) -> (i32, i32) {
    %c0_i32 = arith.constant 0 : i32
    %c0_i32_0 = arith.constant 0 : i32
    return %arg0, %c0_i32 : i32, i32
  }
  func.func @transform_5(%arg0: i32, %arg1: memref<16xi32, #tpu.memory_space<smem>>, %arg2: memref<16xi32, #tpu.memory_space<smem>>) -> (i32, i32) {
    %c0_i32 = arith.constant 0 : i32
    %c0_i32_0 = arith.constant 0 : i32
    %c0_i32_1 = arith.constant 0 : i32
    return %c0_i32, %c0_i32_0 : i32, i32
  }
  func.func @transform_6(%arg0: i32, %arg1: memref<16xi32, #tpu.memory_space<smem>>, %arg2: memref<16xi32, #tpu.memory_space<smem>>) -> (i32, i32) {
    %c0_i32 = arith.constant 0 : i32
    %c0_i32_0 = arith.constant 0 : i32
    %c0_i32_1 = arith.constant 0 : i32
    return %c0_i32, %c0_i32_0 : i32, i32
  }
  func.func @transform_7(%arg0: i32, %arg1: memref<16xi32, #tpu.memory_space<smem>>, %arg2: memref<16xi32, #tpu.memory_space<smem>>) -> (i32, i32) {
    %c0_i32 = arith.constant 0 : i32
    %c0_i32_0 = arith.constant 0 : i32
    %c0_i32_1 = arith.constant 0 : i32
    return %c0_i32, %c0_i32_0 : i32, i32
  }
  func.func @transform_8(%arg0: i32, %arg1: memref<16xi32, #tpu.memory_space<smem>>, %arg2: memref<16xi32, #tpu.memory_space<smem>>) -> (i32, i32) {
    %c0_i32 = arith.constant 0 : i32
    %c0_i32_0 = arith.constant 0 : i32
    %c0_i32_1 = arith.constant 0 : i32
    return %c0_i32, %c0_i32_0 : i32, i32
  }
  func.func @transform_9(%arg0: i32, %arg1: memref<16xi32, #tpu.memory_space<smem>>, %arg2: memref<16xi32, #tpu.memory_space<smem>>) -> (i32, i32) {
    %c0_i32 = arith.constant 0 : i32
    %c0_i32_0 = arith.constant 0 : i32
    %c0_i32_1 = arith.constant 0 : i32
    return %c0_i32, %c0_i32_0 : i32, i32
  }
  func.func @transform_10(%arg0: i32, %arg1: memref<16xi32, #tpu.memory_space<smem>>, %arg2: memref<16xi32, #tpu.memory_space<smem>>) -> (i32, i32) {
    %c0_i32 = arith.constant 0 : i32
    %c0_i32_0 = arith.constant 0 : i32
    %c0_i32_1 = arith.constant 0 : i32
    return %c0_i32, %c0_i32_0 : i32, i32
  }
  func.func @transform_11(%arg0: i32, %arg1: memref<16xi32, #tpu.memory_space<smem>>, %arg2: memref<16xi32, #tpu.memory_space<smem>>) -> (i32, i32) {
    %c0_i32 = arith.constant 0 : i32
    %c0_i32_0 = arith.constant 0 : i32
    %c0_i32_1 = arith.constant 0 : i32
    return %c0_i32, %c0_i32_0 : i32, i32
  }
  func.func @transform_12(%arg0: i32, %arg1: memref<16xi32, #tpu.memory_space<smem>>, %arg2: memref<16xi32, #tpu.memory_space<smem>>) -> (i32, i32) {
    %c0_i32 = arith.constant 0 : i32
    %c0_i32_0 = arith.constant 0 : i32
    %c0_i32_1 = arith.constant 0 : i32
    return %c0_i32, %c0_i32_0 : i32, i32
  }
  func.func @transform_13(%arg0: i32, %arg1: memref<16xi32, #tpu.memory_space<smem>>, %arg2: memref<16xi32, #tpu.memory_space<smem>>) -> (i32, i32) {
    %c0_i32 = arith.constant 0 : i32
    %c0_i32_0 = arith.constant 0 : i32
    %c0_i32_1 = arith.constant 0 : i32
    return %c0_i32, %c0_i32_0 : i32, i32
  }
}

</mosaic_0001>

<llo_original>
// kernel: tpu_custom_call.1
$region0: #{tpu_custom_call.1}
  #allocation0 [shape = 'u32[]', space=smem, size = 0x4, offset = 0x4, fixed_abs, tag = 'smem constant byte address 0x4 - core index']
  #allocation1 [shape = 'u32[144,128]{1,0:T(1,128)}', space=vmem, size = 0x12000, scoped, tag = 'internal scratch']
  #allocation2 [shape = 'f32[8,8]{1,0:T(8,128)}', space=vmem, size = 0x1000, scoped, tag = 'scratch operand']
  #allocation3 [shape = 'f32[8,8]{1,0:T(8,128)}', space=vmem, size = 0x1000, scoped, tag = 'scratch operand']
  #allocation4 [shape = 'f32[8,32]{1,0:T(8,128)}', space=vmem, size = 0x1000, scoped, tag = 'scratch operand']
  #allocation5 [shape = 'f32[8,8]{1,0:T(8,128)}', space=vmem, size = 0x1000, scoped, tag = 'scratch operand']
  #allocation6 [shape = 'f32[8,8]{1,0:T(8,128)}', space=vmem, size = 0x1000, scoped, tag = 'scratch operand']
  #allocation7 [shape = 's32[1]{0}', space=sflag, size = 0x4, scoped, tag = 'scoped memory for tpu_custom_call.1']
  #allocation8 [shape = 'u8[512]{0}', space=smem, size = 0x200, scoped, tag = 'prefetched SMEM operand 0']
  #allocation9 [shape = 'u8[512]{0}', space=smem, size = 0x200, scoped, tag = 'prefetched SMEM operand 1']
  %s0 = inlined_call_operand.vmem [shape: s32[16], index: 0, kind: input, shape index: {}]
  %s1 = inlined_call_operand.vmem [shape: s32[16], index: 1, kind: input, shape index: {}]
  %s2 = inlined_call_operand.vmem [shape: f32[8,8], index: 2, kind: input, shape index: {}]
  %s3 = inlined_call_operand.vmem [shape: f32[8,4], index: 3, kind: input, shape index: {}]
  %s4 = inlined_call_operand.vmem [shape: f32[1,8], index: 4, kind: input, shape index: {}]
  %s5 = inlined_call_operand.vmem [shape: f32[16,4], index: 5, kind: input, shape index: {}]
  %s6 = inlined_call_operand.vmem [shape: f32[16,16], index: 6, kind: input, shape index: {}]
  %s7 = inlined_call_operand.vmem [shape: f32[16,32], index: 7, kind: input, shape index: {}]
  %s8 = inlined_call_operand.vmem [shape: f32[32,32], index: 8, kind: input, shape index: {}]
  %s9 = inlined_call_operand.vmem [shape: f32[32,16], index: 9, kind: input, shape index: {}]
  %s10 = inlined_call_operand.vmem [shape: f32[32,8], index: 10, kind: input, shape index: {}]
  %s11 = inlined_call_operand.vmem [shape: f32[8,32], index: 11, kind: input, shape index: {}]
  %s12 = inlined_call_operand.vmem [shape: f32[4,32], index: 12, kind: input, shape index: {}]
  %s13 = inlined_call_operand.vmem [shape: f32[4,32], index: 13, kind: input, shape index: {}]
  %s14 = inlined_call_operand.vmem [shape: f32[32,8], index: 14, kind: input, shape index: {}]
  %s15 = inlined_call_operand.hbm [shape: f32[8,8], index: 15, kind: output, shape index: {}]
  %s16 = sld [smem:[#allocation0]]
  $region100: #{tpu_custom_call.1} parent=0
    _
  %s18 = ssub.s32 1, %s16
  %s19 = scalar_select 0, %s18, %s16
  %s20 = sshll.u32 %s0, 4
  %s21 = int_to_ptr.vmem [resolvable:$true] %s20
  %23 = dma.vmem_to_smem %s21, 16, [#allocation8], [#allocation7]
  %s24 = sshll.u32 %s1, 4
  %s25 = int_to_ptr.vmem [resolvable:$true] %s24
  %27 = dma.vmem_to_smem %s25, 16, [#allocation9], [#allocation7]
  %28 = dma.done [#allocation7], 32
  %29 = sfence
  $region1: #{tpu_custom_call.1} parent=0
    #allocation10 [shape = 'u8[4096]{0}', space=vmem, size = 0x1000, scoped, tag = 'output window, operand 0, single buffered']
    #allocation11 [shape = 's32[2]{0}', space=sflag, size = 0x8, scoped, tag = 'scoped memory for tpu_custom_call.1']
    %30 = vsyncpa [#allocation11], 0
    loop: start=0, step=1, limit=4
    $region2: #{tpu_custom_call.1} parent=1 // loop_pre_header
      _
    $region3: #{tpu_custom_call.1} parent=1 // loop_header
      %s32 = sphi 0, %s36
      %p33 = scmp.ge.s32.totalorder %s32, 4
      %s40 = sphi 0, %s40
      %s42 = sphi 0, %s40
      %s43 = sphi 0, %s42
      %s57 = sphi 0, %s43
      %s61 = sphi 0, %s61
      %s63 = sphi 0, %s61
      %s64 = sphi 0, %s63
      %s78 = sphi 0, %s64
      %s82 = sphi 0, %s82
      %s84 = sphi 0, %s82
      %s85 = sphi 0, %s84
      %s99 = sphi 0, %s85
      %s105 = sphi 0, %s107
      %s108 = sphi 0, %s105
      %s109 = sphi 0, %s108
      %s125 = sphi 0, %s109
      %s131 = sphi 0, %s133
      %s134 = sphi 0, %s131
      %s135 = sphi 0, %s134
      %s151 = sphi 0, %s135
      %s155 = sphi 0, %s155
      %s157 = sphi 0, %s155
      %s158 = sphi 0, %s157
      %s172 = sphi 0, %s158
      %s176 = sphi 0, %s176
      %s178 = sphi 0, %s176
      %s179 = sphi 0, %s178
      %s193 = sphi 0, %s179
      %s197 = sphi 0, %s197
      %s199 = sphi 0, %s197
      %s200 = sphi 0, %s199
      %s214 = sphi 0, %s200
      %s218 = sphi 0, %s218
      %s220 = sphi 0, %s218
      %s221 = sphi 0, %s220
      %s235 = sphi 0, %s221
      %s239 = sphi 0, %s239
      %s241 = sphi 0, %s239
      %s242 = sphi 0, %s241
      %s256 = sphi 0, %s242
      %s260 = sphi 0, %s260
      %s262 = sphi 0, %s260
      %s263 = sphi 0, %s262
      %s277 = sphi 0, %s263
      %s281 = sphi 0, %s281
      %s283 = sphi 0, %s281
      %s284 = sphi 0, %s283
      %s298 = sphi 0, %s284
      %s302 = sphi 0, %s302
      %s304 = sphi 0, %s302
      %s305 = sphi 0, %s304
      %s319 = sphi 0, %s305
      %s323 = sphi 0, %s323
      %s325 = sphi 0, %s323
      %s326 = sphi 0, %s325
      %s340 = sphi 0, %s326
    $region4: #{tpu_custom_call.1} parent=1 // loop_header_branch
      %35 = sbr.rel (%p33) target = $region8
    $region5: #{tpu_custom_call.1} parent=1 // loop_body
      %s37 = ssub.s32 %s32, 1
      %s38 = ssub.s32 %s32, 2
      %s39 = sadd.s32 %s32, 1
      %s41 = sadd.s32 %s40, 1
      %p44 = scmp.eq.s32.totalorder %s32, 1
      %p45 = scmp.ne.s32.totalorder %s40, %s42
      %p46 = scmp.eq.s32.totalorder %s32, 0
      %p47 = por %p45, %p46
      %p48 = scmp.ne.s32.totalorder %s40, %s42
      %p49 = scmp.eq.s32.totalorder %s37, 1
      %p50 = por %p48, %p49
      %p51 = scmp.ne.s32.totalorder %s42, %s43
      %p52 = scmp.eq.s32.totalorder %s37, 0
      %p53 = por %p51, %p52
      %p54 = scmp.ne.s32.totalorder %s42, %s43
      %p55 = scmp.eq.s32.totalorder %s38, 1
      %p56 = por %p54, %p55
      %p58 = scmp.ne.s32.totalorder %s43, %s57
      %p59 = scmp.eq.s32.totalorder %s38, 0
      %p60 = por %p58, %p59
      %s62 = sadd.s32 %s61, 1
      %p65 = scmp.eq.s32.totalorder %s32, 1
      %p66 = scmp.ne.s32.totalorder %s61, %s63
      %p67 = scmp.eq.s32.totalorder %s32, 0
      %p68 = por %p66, %p67
      %p69 = scmp.ne.s32.totalorder %s61, %s63
      %p70 = scmp.eq.s32.totalorder %s37, 1
      %p71 = por %p69, %p70
      %p72 = scmp.ne.s32.totalorder %s63, %s64
      %p73 = scmp.eq.s32.totalorder %s37, 0
      %p74 = por %p72, %p73
      %p75 = scmp.ne.s32.totalorder %s63, %s64
      %p76 = scmp.eq.s32.totalorder %s38, 1
      %p77 = por %p75, %p76
      %p79 = scmp.ne.s32.totalorder %s64, %s78
      %p80 = scmp.eq.s32.totalorder %s38, 0
      %p81 = por %p79, %p80
      %s83 = sadd.s32 %s82, 1
      %p86 = scmp.eq.s32.totalorder %s32, 1
      %p87 = scmp.ne.s32.totalorder %s82, %s84
      %p88 = scmp.eq.s32.totalorder %s32, 0
      %p89 = por %p87, %p88
      %p90 = scmp.ne.s32.totalorder %s82, %s84
      %p91 = scmp.eq.s32.totalorder %s37, 1
      %p92 = por %p90, %p91
      %p93 = scmp.ne.s32.totalorder %s84, %s85
      %p94 = scmp.eq.s32.totalorder %s37, 0
      %p95 = por %p93, %p94
      %p96 = scmp.ne.s32.totalorder %s84, %s85
      %p97 = scmp.eq.s32.totalorder %s38, 1
      %p98 = por %p96, %p97
      %p100 = scmp.ne.s32.totalorder %s85, %s99
      %p101 = scmp.eq.s32.totalorder %s38, 0
      %p102 = por %p100, %p101
      %s103 = ssub.s32 %s32, %s39
      %p104 = scmp.eq.s32.totalorder %s103, 0
      %s106 = sadd.s32 %s105, 1
      %s107 = scalar_select %p104, %s105, %s106
      %p110 = pneg %p104
      %p111 = scmp.eq.s32.totalorder %s32, 1
      %p112 = por %p110, %p111
      %p113 = scmp.ne.s32.totalorder %s105, %s108
      %p114 = scmp.eq.s32.totalorder %s32, 0
      %p115 = por %p113, %p114
      %p116 = scmp.ne.s32.totalorder %s105, %s108
      %p117 = scmp.eq.s32.totalorder %s37, 1
      %p118 = por %p116, %p117
      %p119 = scmp.ne.s32.totalorder %s108, %s109
      %p120 = scmp.eq.s32.totalorder %s37, 0
      %p121 = por %p119, %p120
      %p122 = scmp.ne.s32.totalorder %s108, %s109
      %p123 = scmp.eq.s32.totalorder %s38, 1
      %p124 = por %p122, %p123
      %p126 = scmp.ne.s32.totalorder %s109, %s125
      %p127 = scmp.eq.s32.totalorder %s38, 0
      %p128 = por %p126, %p127
      %s129 = ssub.s32 %s32, %s39
      %p130 = scmp.eq.s32.totalorder %s129, 0
      %s132 = sadd.s32 %s131, 1
      %s133 = scalar_select %p130, %s131, %s132
      %p136 = pneg %p130
      %p137 = scmp.eq.s32.totalorder %s32, 1
      %p138 = por %p136, %p137
      %p139 = scmp.ne.s32.totalorder %s131, %s134
      %p140 = scmp.eq.s32.totalorder %s32, 0
      %p141 = por %p139, %p140
      %p142 = scmp.ne.s32.totalorder %s131, %s134
      %p143 = scmp.eq.s32.totalorder %s37, 1
      %p144 = por %p142, %p143
      %p145 = scmp.ne.s32.totalorder %s134, %s135
      %p146 = scmp.eq.s32.totalorder %s37, 0
      %p147 = por %p145, %p146
      %p148 = scmp.ne.s32.totalorder %s134, %s135
      %p149 = scmp.eq.s32.totalorder %s38, 1
      %p150 = por %p148, %p149
      %p152 = scmp.ne.s32.totalorder %s135, %s151
      %p153 = scmp.eq.s32.totalorder %s38, 0
      %p154 = por %p152, %p153
      %s156 = sadd.s32 %s155, 1
      %p159 = scmp.eq.s32.totalorder %s32, 1
      %p160 = scmp.ne.s32.totalorder %s155, %s157
      %p161 = scmp.eq.s32.totalorder %s32, 0
      %p162 = por %p160, %p161
      %p163 = scmp.ne.s32.totalorder %s155, %s157
      %p164 = scmp.eq.s32.totalorder %s37, 1
      %p165 = por %p163, %p164
      %p166 = scmp.ne.s32.totalorder %s157, %s158
      %p167 = scmp.eq.s32.totalorder %s37, 0
      %p168 = por %p166, %p167
      %p169 = scmp.ne.s32.totalorder %s157, %s158
      %p170 = scmp.eq.s32.totalorder %s38, 1
      %p171 = por %p169, %p170
      %p173 = scmp.ne.s32.totalorder %s158, %s172
      %p174 = scmp.eq.s32.totalorder %s38, 0
      %p175 = por %p173, %p174
      %s177 = sadd.s32 %s176, 1
      %p180 = scmp.eq.s32.totalorder %s32, 1
      %p181 = scmp.ne.s32.totalorder %s176, %s178
      %p182 = scmp.eq.s32.totalorder %s32, 0
      %p183 = por %p181, %p182
      %p184 = scmp.ne.s32.totalorder %s176, %s178
      %p185 = scmp.eq.s32.totalorder %s37, 1
      %p186 = por %p184, %p185
      %p187 = scmp.ne.s32.totalorder %s178, %s179
      %p188 = scmp.eq.s32.totalorder %s37, 0
      %p189 = por %p187, %p188
      %p190 = scmp.ne.s32.totalorder %s178, %s179
      %p191 = scmp.eq.s32.totalorder %s38, 1
      %p192 = por %p190, %p191
      %p194 = scmp.ne.s32.totalorder %s179, %s193
      %p195 = scmp.eq.s32.totalorder %s38, 0
      %p196 = por %p194, %p195
      %s198 = sadd.s32 %s197, 1
      %p201 = scmp.eq.s32.totalorder %s32, 1
      %p202 = scmp.ne.s32.totalorder %s197, %s199
      %p203 = scmp.eq.s32.totalorder %s32, 0
      %p204 = por %p202, %p203
      %p205 = scmp.ne.s32.totalorder %s197, %s199
      %p206 = scmp.eq.s32.totalorder %s37, 1
      %p207 = por %p205, %p206
      %p208 = scmp.ne.s32.totalorder %s199, %s200
      %p209 = scmp.eq.s32.totalorder %s37, 0
      %p210 = por %p208, %p209
      %p211 = scmp.ne.s32.totalorder %s199, %s200
      %p212 = scmp.eq.s32.totalorder %s38, 1
      %p213 = por %p211, %p212
      %p215 = scmp.ne.s32.totalorder %s200, %s214
      %p216 = scmp.eq.s32.totalorder %s38, 0
      %p217 = por %p215, %p216
      %s219 = sadd.s32 %s218, 1
      %p222 = scmp.eq.s32.totalorder %s32, 1
      %p223 = scmp.ne.s32.totalorder %s218, %s220
      %p224 = scmp.eq.s32.totalorder %s32, 0
      %p225 = por %p223, %p224
      %p226 = scmp.ne.s32.totalorder %s218, %s220
      %p227 = scmp.eq.s32.totalorder %s37, 1
      %p228 = por %p226, %p227
      %p229 = scmp.ne.s32.totalorder %s220, %s221
      %p230 = scmp.eq.s32.totalorder %s37, 0
      %p231 = por %p229, %p230
      %p232 = scmp.ne.s32.totalorder %s220, %s221
      %p233 = scmp.eq.s32.totalorder %s38, 1
      %p234 = por %p232, %p233
      %p236 = scmp.ne.s32.totalorder %s221, %s235
      %p237 = scmp.eq.s32.totalorder %s38, 0
      %p238 = por %p236, %p237
      %s240 = sadd.s32 %s239, 1
      %p243 = scmp.eq.s32.totalorder %s32, 1
      %p244 = scmp.ne.s32.totalorder %s239, %s241
      %p245 = scmp.eq.s32.totalorder %s32, 0
      %p246 = por %p244, %p245
      %p247 = scmp.ne.s32.totalorder %s239, %s241
      %p248 = scmp.eq.s32.totalorder %s37, 1
      %p249 = por %p247, %p248
      %p250 = scmp.ne.s32.totalorder %s241, %s242
      %p251 = scmp.eq.s32.totalorder %s37, 0
      %p252 = por %p250, %p251
      %p253 = scmp.ne.s32.totalorder %s241, %s242
      %p254 = scmp.eq.s32.totalorder %s38, 1
      %p255 = por %p253, %p254
      %p257 = scmp.ne.s32.totalorder %s242, %s256
      %p258 = scmp.eq.s32.totalorder %s38, 0
      %p259 = por %p257, %p258
      %s261 = sadd.s32 %s260, 1
      %p264 = scmp.eq.s32.totalorder %s32, 1
      %p265 = scmp.ne.s32.totalorder %s260, %s262
      %p266 = scmp.eq.s32.totalorder %s32, 0
      %p267 = por %p265, %p266
      %p268 = scmp.ne.s32.totalorder %s260, %s262
      %p269 = scmp.eq.s32.totalorder %s37, 1
      %p270 = por %p268, %p269
      %p271 = scmp.ne.s32.totalorder %s262, %s263
      %p272 = scmp.eq.s32.totalorder %s37, 0
      %p273 = por %p271, %p272
      %p274 = scmp.ne.s32.totalorder %s262, %s263
      %p275 = scmp.eq.s32.totalorder %s38, 1
      %p276 = por %p274, %p275
      %p278 = scmp.ne.s32.totalorder %s263, %s277
      %p279 = scmp.eq.s32.totalorder %s38, 0
      %p280 = por %p278, %p279
      %s282 = sadd.s32 %s281, 1
      %p285 = scmp.eq.s32.totalorder %s32, 1
      %p286 = scmp.ne.s32.totalorder %s281, %s283
      %p287 = scmp.eq.s32.totalorder %s32, 0
      %p288 = por %p286, %p287
      %p289 = scmp.ne.s32.totalorder %s281, %s283
      %p290 = scmp.eq.s32.totalorder %s37, 1
      %p291 = por %p289, %p290
      %p292 = scmp.ne.s32.totalorder %s283, %s284
      %p293 = scmp.eq.s32.totalorder %s37, 0
      %p294 = por %p292, %p293
      %p295 = scmp.ne.s32.totalorder %s283, %s284
      %p296 = scmp.eq.s32.totalorder %s38, 1
      %p297 = por %p295, %p296
      %p299 = scmp.ne.s32.totalorder %s284, %s298
      %p300 = scmp.eq.s32.totalorder %s38, 0
      %p301 = por %p299, %p300
      %s303 = sadd.s32 %s302, 1
      %p306 = scmp.eq.s32.totalorder %s32, 1
      %p307 = scmp.ne.s32.totalorder %s302, %s304
      %p308 = scmp.eq.s32.totalorder %s32, 0
      %p309 = por %p307, %p308
      %p310 = scmp.ne.s32.totalorder %s302, %s304
      %p311 = scmp.eq.s32.totalorder %s37, 1
      %p312 = por %p310, %p311
      %p313 = scmp.ne.s32.totalorder %s304, %s305
      %p314 = scmp.eq.s32.totalorder %s37, 0
      %p315 = por %p313, %p314
      %p316 = scmp.ne.s32.totalorder %s304, %s305
      %p317 = scmp.eq.s32.totalorder %s38, 1
      %p318 = por %p316, %p317
      %p320 = scmp.ne.s32.totalorder %s305, %s319
      %p321 = scmp.eq.s32.totalorder %s38, 0
      %p322 = por %p320, %p321
      %s324 = sadd.s32 %s323, 1
      %p327 = scmp.eq.s32.totalorder %s32, 1
      %p328 = scmp.ne.s32.totalorder %s323, %s325
      %p329 = scmp.eq.s32.totalorder %s32, 0
      %p330 = por %p328, %p329
      %p331 = scmp.ne.s32.totalorder %s323, %s325
      %p332 = scmp.eq.s32.totalorder %s37, 1
      %p333 = por %p331, %p332
      %p334 = scmp.ne.s32.totalorder %s325, %s326
      %p335 = scmp.eq.s32.totalorder %s37, 0
      %p336 = por %p334, %p335
      %p337 = scmp.ne.s32.totalorder %s325, %s326
      %p338 = scmp.eq.s32.totalorder %s38, 1
      %p339 = por %p337, %p338
      %p341 = scmp.ne.s32.totalorder %s326, %s340
      %p342 = scmp.eq.s32.totalorder %s38, 0
      %p343 = por %p341, %p342
      %p344 = scmp.le.s32.totalorder 1, %s32
      %p345 = scmp.lt.s32.totalorder %s32, 3
      %p346 = pnand %p344, %p345
      %p347 = pneg %p346
      // Predicated region
      $region9: #{tpu_custom_call.1} parent=5 // pred_check
        _
      $region10: #{tpu_custom_call.1} parent=5 // pred_check_branch
        %349 = sbr.rel (%p346) target = $region12
      $region11: #{tpu_custom_call.1} parent=5 // pred_region
        %s350 = ssub.s32 %s32, 1
        // Predicated region
        $region13: #{tpu_custom_call.1} parent=11 // pred_check
          %p351 = pneg %p53
        $region14: #{tpu_custom_call.1} parent=11 // pred_check_branch
          %353 = sbr.rel (%p351) target = $region16
        $region15: #{tpu_custom_call.1} parent=11 // pred_region
          _
        $region16: #{tpu_custom_call.1} parent=11 // pred_fallthru
          _
        // Predicated region
        $region17: #{tpu_custom_call.1} parent=11 // pred_check
          %p354 = pneg %p74
        $region18: #{tpu_custom_call.1} parent=11 // pred_check_branch
          %356 = sbr.rel (%p354) target = $region20
        $region19: #{tpu_custom_call.1} parent=11 // pred_region
          _
        $region20: #{tpu_custom_call.1} parent=11 // pred_fallthru
          _
        // Predicated region
        $region21: #{tpu_custom_call.1} parent=11 // pred_check
          %p357 = pneg %p95
        $region22: #{tpu_custom_call.1} parent=11 // pred_check_branch
          %359 = sbr.rel (%p357) target = $region24
        $region23: #{tpu_custom_call.1} parent=11 // pred_region
          _
        $region24: #{tpu_custom_call.1} parent=11 // pred_fallthru
          _
        // Predicated region
        $region25: #{tpu_custom_call.1} parent=11 // pred_check
          %p360 = pneg %p168
        $region26: #{tpu_custom_call.1} parent=11 // pred_check_branch
          %362 = sbr.rel (%p360) target = $region28
        $region27: #{tpu_custom_call.1} parent=11 // pred_region
          _
        $region28: #{tpu_custom_call.1} parent=11 // pred_fallthru
          _
        // Predicated region
        $region29: #{tpu_custom_call.1} parent=11 // pred_check
          %p363 = pneg %p189
        $region30: #{tpu_custom_call.1} parent=11 // pred_check_branch
          %365 = sbr.rel (%p363) target = $region32
        $region31: #{tpu_custom_call.1} parent=11 // pred_region
          _
        $region32: #{tpu_custom_call.1} parent=11 // pred_fallthru
          _
        // Predicated region
        $region33: #{tpu_custom_call.1} parent=11 // pred_check
          %p366 = pneg %p210
        $region34: #{tpu_custom_call.1} parent=11 // pred_check_branch
          %368 = sbr.rel (%p366) target = $region36
        $region35: #{tpu_custom_call.1} parent=11 // pred_region
          _
        $region36: #{tpu_custom_call.1} parent=11 // pred_fallthru
          _
        // Predicated region
        $region37: #{tpu_custom_call.1} parent=11 // pred_check
          %p369 = pneg %p231
        $region38: #{tpu_custom_call.1} parent=11 // pred_check_branch
          %371 = sbr.rel (%p369) target = $region40
        $region39: #{tpu_custom_call.1} parent=11 // pred_region
          _
        $region40: #{tpu_custom_call.1} parent=11 // pred_fallthru
          _
        // Predicated region
        $region41: #{tpu_custom_call.1} parent=11 // pred_check
          %p372 = pneg %p252
        $region42: #{tpu_custom_call.1} parent=11 // pred_check_branch
          %374 = sbr.rel (%p372) target = $region44
        $region43: #{tpu_custom_call.1} parent=11 // pred_region
          _
        $region44: #{tpu_custom_call.1} parent=11 // pred_fallthru
          _
        // Predicated region
        $region45: #{tpu_custom_call.1} parent=11 // pred_check
          %p375 = pneg %p273
        $region46: #{tpu_custom_call.1} parent=11 // pred_check_branch
          %377 = sbr.rel (%p375) target = $region48
        $region47: #{tpu_custom_call.1} parent=11 // pred_region
          _
        $region48: #{tpu_custom_call.1} parent=11 // pred_fallthru
          _
        // Predicated region
        $region49: #{tpu_custom_call.1} parent=11 // pred_check
          %p378 = pneg %p294
        $region50: #{tpu_custom_call.1} parent=11 // pred_check_branch
          %380 = sbr.rel (%p378) target = $region52
        $region51: #{tpu_custom_call.1} parent=11 // pred_region
          _
        $region52: #{tpu_custom_call.1} parent=11 // pred_fallthru
          _
        // Predicated region
        $region53: #{tpu_custom_call.1} parent=11 // pred_check
          %p381 = pneg %p315
        $region54: #{tpu_custom_call.1} parent=11 // pred_check_branch
          %383 = sbr.rel (%p381) target = $region56
        $region55: #{tpu_custom_call.1} parent=11 // pred_region
          _
        $region56: #{tpu_custom_call.1} parent=11 // pred_fallthru
          _
      $region12: #{tpu_custom_call.1} parent=5 // pred_fallthru
        _
      %p384 = scmp.lt.s32.totalorder %s32, 2
      // Predicated region
      $region57: #{tpu_custom_call.1} parent=5 // pred_check
        %p385 = pneg %p384
      $region58: #{tpu_custom_call.1} parent=5 // pred_check_branch
        %387 = sbr.rel (%p385) target = $region60
      $region59: #{tpu_custom_call.1} parent=5 // pred_region
        // Predicated region
        $region61: #{tpu_custom_call.1} parent=59 // pred_check
          %p388 = pneg %p115
        $region62: #{tpu_custom_call.1} parent=59 // pred_check_branch
          %390 = sbr.rel (%p388) target = $region64
        $region63: #{tpu_custom_call.1} parent=59 // pred_region
          %p391 = scmp.lt.s32.totalorder %s32, 1
          %s392 = scalar_select %p391, %s32, 1
          %s393 = smul.addr %s392, 8
          %s394 = scalar_lea.vmem %s5, %s393
        $region64: #{tpu_custom_call.1} parent=59 // pred_fallthru
          _
        // Predicated region
        $region65: #{tpu_custom_call.1} parent=59 // pred_check
          %p395 = pneg %p141
        $region66: #{tpu_custom_call.1} parent=59 // pred_check_branch
          %397 = sbr.rel (%p395) target = $region68
        $region67: #{tpu_custom_call.1} parent=59 // pred_region
          %p398 = scmp.lt.s32.totalorder %s32, 1
          %s399 = scalar_select %p398, %s32, 1
          %s400 = smul.addr %s399, 8
          %s401 = scalar_lea.vmem %s6, %s400
        $region68: #{tpu_custom_call.1} parent=59 // pred_fallthru
          _
      $region60: #{tpu_custom_call.1} parent=5 // pred_fallthru
        _
      %p402 = scmp.le.s32.totalorder 1, %s32
      %p403 = scmp.lt.s32.totalorder %s32, 3
      %p404 = pnand %p402, %p403
      %p405 = pneg %p404
      // Predicated region
      $region69: #{tpu_custom_call.1} parent=5 // pred_check
        _
      $region70: #{tpu_custom_call.1} parent=5 // pred_check_branch
        %407 = sbr.rel (%p404) target = $region72
      $region71: #{tpu_custom_call.1} parent=5 // pred_region
        %s408 = ssub.s32 %s32, 1
        %p409 = pneg %p53
        %p410 = pneg %p50
        %p411 = pneg %p74
        %p412 = pneg %p71
        %p413 = pneg %p95
        %p414 = pneg %p92
        %p415 = scmp.lt.s32.totalorder %s37, 1
        %s416 = scalar_select %p415, %s37, 1
        %s417 = smul.addr %s416, 8
        %s418 = scalar_lea.vmem %s5, %s417
        %p419 = pneg %p121
        %p420 = pneg %p118
        %p421 = scmp.lt.s32.totalorder %s37, 1
        %s422 = scalar_select %p421, %s37, 1
        %s423 = smul.addr %s422, 8
        %s424 = scalar_lea.vmem %s6, %s423
        %p425 = pneg %p147
        %p426 = pneg %p144
        %p427 = pneg %p168
        %p428 = pneg %p165
        %p429 = pneg %p189
        %p430 = pneg %p186
        %p431 = pneg %p210
        %p432 = pneg %p207
        %p433 = pneg %p231
        %p434 = pneg %p228
        %p435 = pneg %p252
        %p436 = pneg %p249
        %p437 = pneg %p273
        %p438 = pneg %p270
        %p439 = pneg %p294
        %p440 = pneg %p291
        %p441 = pneg %p315
        %p442 = pneg %p312
        %p443 = pneg %p336
        %p444 = pneg %p333
        %p445 = scmp.lt.s32.totalorder %s37, 1
        %s446 = scalar_select %p445, %s37, 1
        %s447 = smul.addr %s446, 8
        %s448 = scalar_lea.vmem %s5, %s447
        %p449 = scmp.lt.s32.totalorder %s37, 1
        %s450 = scalar_select %p449, %s37, 1
        %s451 = smul.addr %s450, 8
        %s452 = scalar_lea.vmem %s6, %s451
        %p453 = scmp.eq.s32.totalorder %s37, 0
        // Predicated region
        $region73: #{tpu_custom_call.1} parent=71 // pred_check
          %p454 = pneg %p453
        $region74: #{tpu_custom_call.1} parent=71 // pred_check_branch
          %456 = sbr.rel (%p454) target = $region76
        $region75: #{tpu_custom_call.1} parent=71 // pred_region
          %v457 = vld [vmem:[%s3] sm:$0xff]
          %v458 = vld [vmem:[%s12] sm:$0xf]
          %vm459 = vcmask 31744
          %v461 = vsel %vm459, %v457, 0
          %vm463 = vcmask 1043456
          %v465 = vsel %vm463, %v458, 0
          %467 = vmatprep.subr.mxu0 0.0
          %468 = vmatpush1.msra.mxu0 %v465
          %469 = vmatprep.subr.mxu0 0.0
          %470 = vmatpush1.msra.mxu0 0.0
          %471 = vmatprep.subr.mxu0 0.0
          %472 = vmatpush1.msra.mxu0 0.0
          %473 = vmatprep.subr.mxu0 0.0
          %474 = vmatpush1.msra.mxu0 0.0
          %475 = vmatprep.subr.mxu0 0.0
          %476 = vmatpush1.msra.mxu0 0.0
          %477 = vmatprep.subr.mxu0 0.0
          %478 = vmatpush1.msra.mxu0 0.0
          %479 = vmatprep.subr.mxu0 0.0
          %480 = vmatpush1.msra.mxu0 0.0
          %481 = vmatprep.subr.mxu0 0.0
          %482 = vmatpush1.msra.mxu0 0.0
          %483 = vmatprep.subr.mxu0 0.0
          %484 = vmatpush1.msra.mxu0 0.0
          %485 = vmatprep.subr.mxu0 0.0
          %486 = vmatpush1.msra.mxu0 0.0
          %487 = vmatprep.subr.mxu0 0.0
          %488 = vmatpush1.msra.mxu0 0.0
          %489 = vmatprep.subr.mxu0 0.0
          %490 = vmatpush1.msra.mxu0 0.0
          %491 = vmatprep.subr.mxu0 0.0
          %492 = vmatpush1.msra.mxu0 0.0
          %493 = vmatprep.subr.mxu0 0.0
          %494 = vmatpush1.msra.mxu0 0.0
          %495 = vmatprep.subr.mxu0 0.0
          %496 = vmatpush1.msra.mxu0 0.0
          %497 = vmatprep.subr.mxu0 0.0
          %498 = vmatpush1.msra.mxu0 0.0
          %499 = vmatprep.subr.mxu0 0.0
          %500 = vmatpush1.msra.mxu0 0.0
          %501 = vmatprep.subr.mxu0 0.0
          %502 = vmatpush1.msra.mxu0 0.0
          %503 = vmatprep.subr.mxu0 0.0
          %504 = vmatpush1.msra.mxu0 0.0
          %505 = vmatprep.subr.mxu0 0.0
          %506 = vmatpush1.msra.mxu0 0.0
          %507 = vmatprep.subr.mxu0 0.0
          %508 = vmatpush1.msra.mxu0 0.0
          %509 = vmatprep.subr.mxu0 0.0
          %510 = vmatpush1.msra.mxu0 0.0
          %511 = vmatprep.subr.mxu0 0.0
          %512 = vmatpush1.msra.mxu0 0.0
          %513 = vmatprep.subr.mxu0 0.0
          %514 = vmatpush1.msra.mxu0 0.0
          %515 = vmatprep.subr.mxu0 0.0
          %516 = vmatpush1.msra.mxu0 0.0
          %517 = vmatprep.subr.mxu0 0.0
          %518 = vmatpush1.msra.mxu0 0.0
          %519 = vmatprep.subr.mxu0 0.0
          %520 = vmatpush1.msra.mxu0 0.0
          %521 = vmatprep.subr.mxu0 0.0
          %522 = vmatpush1.msra.mxu0 0.0
          %523 = vmatprep.subr.mxu0 0.0
          %524 = vmatpush1.msra.mxu0 0.0
          %525 = vmatprep.subr.mxu0 0.0
          %526 = vmatpush1.msra.mxu0 0.0
          %527 = vmatprep.subr.mxu0 0.0
          %528 = vmatpush1.msra.mxu0 0.0
          %529 = vmatprep.subr.mxu0 0.0
          %530 = vmatpush1.msra.mxu0 0.0
          %531 = vmatprep.mubr.f32.mxu0 0.0
          %532 = vmatmul.mubr.f32.gmra.mrb[0].mxu0 %v461
          %v533 = vpop.f32.mrb[0].mxu0
          %v534 = vadd.f32 0.0, %v533
          %v535 = vpop.f32.mrb[0].mxu0
          %536 = vdwg.mxu0
          %v537 = vld [vmem:[%s2] sm:$0xff]
          %v538 = vld [vmem:[%s11] sm:$0xff]
          %vm539 = vcmask 64512
          %v541 = vsel %vm539, %v537, 0
          %543 = vmatprep.subr.mxu0 0.0
          %544 = vmatpush1.msra.mxu0 %v538
          %545 = vmatprep.subr.mxu0 0.0
          %546 = vmatpush1.msra.mxu0 0.0
          %547 = vmatprep.subr.mxu0 0.0
          %548 = vmatpush1.msra.mxu0 0.0
          %549 = vmatprep.subr.mxu0 0.0
          %550 = vmatpush1.msra.mxu0 0.0
          %551 = vmatprep.subr.mxu0 0.0
          %552 = vmatpush1.msra.mxu0 0.0
          %553 = vmatprep.subr.mxu0 0.0
          %554 = vmatpush1.msra.mxu0 0.0
          %555 = vmatprep.subr.mxu0 0.0
          %556 = vmatpush1.msra.mxu0 0.0
          %557 = vmatprep.subr.mxu0 0.0
          %558 = vmatpush1.msra.mxu0 0.0
          %559 = vmatprep.subr.mxu0 0.0
          %560 = vmatpush1.msra.mxu0 0.0
          %561 = vmatprep.subr.mxu0 0.0
          %562 = vmatpush1.msra.mxu0 0.0
          %563 = vmatprep.subr.mxu0 0.0
          %564 = vmatpush1.msra.mxu0 0.0
          %565 = vmatprep.subr.mxu0 0.0
          %566 = vmatpush1.msra.mxu0 0.0
          %567 = vmatprep.subr.mxu0 0.0
          %568 = vmatpush1.msra.mxu0 0.0
          %569 = vmatprep.subr.mxu0 0.0
          %570 = vmatpush1.msra.mxu0 0.0
          %571 = vmatprep.subr.mxu0 0.0
          %572 = vmatpush1.msra.mxu0 0.0
          %573 = vmatprep.subr.mxu0 0.0
          %574 = vmatpush1.msra.mxu0 0.0
          %575 = vmatprep.subr.mxu0 0.0
          %576 = vmatpush1.msra.mxu0 0.0
          %577 = vmatprep.subr.mxu0 0.0
          %578 = vmatpush1.msra.mxu0 0.0
          %579 = vmatprep.subr.mxu0 0.0
          %580 = vmatpush1.msra.mxu0 0.0
          %581 = vmatprep.subr.mxu0 0.0
          %582 = vmatpush1.msra.mxu0 0.0
          %583 = vmatprep.subr.mxu0 0.0
          %584 = vmatpush1.msra.mxu0 0.0
          %585 = vmatprep.subr.mxu0 0.0
          %586 = vmatpush1.msra.mxu0 0.0
          %587 = vmatprep.subr.mxu0 0.0
          %588 = vmatpush1.msra.mxu0 0.0
          %589 = vmatprep.subr.mxu0 0.0
          %590 = vmatpush1.msra.mxu0 0.0
          %591 = vmatprep.subr.mxu0 0.0
          %592 = vmatpush1.msra.mxu0 0.0
          %593 = vmatprep.subr.mxu0 0.0
          %594 = vmatpush1.msra.mxu0 0.0
          %595 = vmatprep.subr.mxu0 0.0
          %596 = vmatpush1.msra.mxu0 0.0
          %597 = vmatprep.subr.mxu0 0.0
          %598 = vmatpush1.msra.mxu0 0.0
          %599 = vmatprep.subr.mxu0 0.0
          %600 = vmatpush1.msra.mxu0 0.0
          %601 = vmatprep.subr.mxu0 0.0
          %602 = vmatpush1.msra.mxu0 0.0
          %603 = vmatprep.subr.mxu0 0.0
          %604 = vmatpush1.msra.mxu0 0.0
          %605 = vmatprep.subr.mxu0 0.0
          %606 = vmatpush1.msra.mxu0 0.0
          %607 = vmatprep.mubr.f32.mxu0 0.0
          %608 = vmatmul.mubr.f32.gmra.mrb[0].mxu0 %v541
          %v609 = vpop.f32.mrb[0].mxu0
          %v610 = vadd.f32 0.0, %v609
          %v611 = vpop.f32.mrb[0].mxu0
          %612 = vdwg.mxu0
          %v613 = vmul.f32 %v610, %v534
          %v614 = vld [vmem:[%s9] sm:$0xff]
          %v615 = vld [vmem:[%s9 + $0x8] sm:$0xff]
          %v616 = vld [vmem:[%s9 + $0x10] sm:$0xff]
          %v617 = vld [vmem:[%s9 + $0x18] sm:$0xff]
          %vm618 = vcmask 261120
          %v620 = vsel %vm618, %v613, 0
          %622 = vmatprep.subr.mxu0 0.0
          %623 = vmatpush1.msra.mxu0 %v614
          %624 = vmatprep.subr.mxu0 0.0
          %625 = vmatpush1.msra.mxu0 %v615
          %626 = vmatprep.subr.mxu0 0.0
          %627 = vmatpush1.msra.mxu0 %v616
          %628 = vmatprep.subr.mxu0 0.0
          %629 = vmatpush1.msra.mxu0 %v617
          %630 = vmatprep.subr.mxu0 0.0
          %631 = vmatpush1.msra.mxu0 0.0
          %632 = vmatprep.subr.mxu0 0.0
          %633 = vmatpush1.msra.mxu0 0.0
          %634 = vmatprep.subr.mxu0 0.0
          %635 = vmatpush1.msra.mxu0 0.0
          %636 = vmatprep.subr.mxu0 0.0
          %637 = vmatpush1.msra.mxu0 0.0
          %638 = vmatprep.subr.mxu0 0.0
          %639 = vmatpush1.msra.mxu0 0.0
          %640 = vmatprep.subr.mxu0 0.0
          %641 = vmatpush1.msra.mxu0 0.0
          %642 = vmatprep.subr.mxu0 0.0
          %643 = vmatpush1.msra.mxu0 0.0
          %644 = vmatprep.subr.mxu0 0.0
          %645 = vmatpush1.msra.mxu0 0.0
          %646 = vmatprep.subr.mxu0 0.0
          %647 = vmatpush1.msra.mxu0 0.0
          %648 = vmatprep.subr.mxu0 0.0
          %649 = vmatpush1.msra.mxu0 0.0
          %650 = vmatprep.subr.mxu0 0.0
          %651 = vmatpush1.msra.mxu0 0.0
          %652 = vmatprep.subr.mxu0 0.0
          %653 = vmatpush1.msra.mxu0 0.0
          %654 = vmatprep.subr.mxu0 0.0
          %655 = vmatpush1.msra.mxu0 0.0
          %656 = vmatprep.subr.mxu0 0.0
          %657 = vmatpush1.msra.mxu0 0.0
          %658 = vmatprep.subr.mxu0 0.0
          %659 = vmatpush1.msra.mxu0 0.0
          %660 = vmatprep.subr.mxu0 0.0
          %661 = vmatpush1.msra.mxu0 0.0
          %662 = vmatprep.subr.mxu0 0.0
          %663 = vmatpush1.msra.mxu0 0.0
          %664 = vmatprep.subr.mxu0 0.0
          %665 = vmatpush1.msra.mxu0 0.0
          %666 = vmatprep.subr.mxu0 0.0
          %667 = vmatpush1.msra.mxu0 0.0
          %668 = vmatprep.subr.mxu0 0.0
          %669 = vmatpush1.msra.mxu0 0.0
          %670 = vmatprep.subr.mxu0 0.0
          %671 = vmatpush1.msra.mxu0 0.0
          %672 = vmatprep.subr.mxu0 0.0
          %673 = vmatpush1.msra.mxu0 0.0
          %674 = vmatprep.subr.mxu0 0.0
          %675 = vmatpush1.msra.mxu0 0.0
          %676 = vmatprep.subr.mxu0 0.0
          %677 = vmatpush1.msra.mxu0 0.0
          %678 = vmatprep.subr.mxu0 0.0
          %679 = vmatpush1.msra.mxu0 0.0
          %680 = vmatprep.subr.mxu0 0.0
          %681 = vmatpush1.msra.mxu0 0.0
          %682 = vmatprep.subr.mxu0 0.0
          %683 = vmatpush1.msra.mxu0 0.0
          %684 = vmatprep.subr.mxu0 0.0
          %685 = vmatpush1.msra.mxu0 0.0
          %686 = vmatprep.mubr.f32.mxu0 0.0
          %687 = vmatmul.mubr.f32.gmra.mrb[0].mxu0 %v620
          %v688 = vpop.f32.mrb[0].mxu0
          %v689 = vadd.f32 0.0, %v688
          %v690 = vpop.f32.mrb[0].mxu0
          %691 = vdwg.mxu0
          %v692 = vmul.f32 %v689, 0.17677669
          %693 = vst.msk [vmem:[#allocation2] sm:$0xff] %vm539, %v692
          %695 = vrot.lane.b32.xlu0 %v692, 120
          %v696 = vpop.permute.xlu0 %695
          %698 = vst.msk [vmem:[#allocation3] sm:$0xff] %vm539, %v696
          %699 = vst.msk [vmem:[#allocation4] sm:$0xff] %vm618, %v534
          %700 = vst.msk [vmem:[#allocation5] sm:$0xff] %vm539, 0.0
        $region76: #{tpu_custom_call.1} parent=71 // pred_fallthru
          _
        %v701 = vld [vmem:[%s452] sm:$0xff]
        %v702 = vld [vmem:[%s7] sm:$0xff]
        %v703 = vld [vmem:[%s7 + $0x8] sm:$0xff]
        %vm704 = vcmask 130048
        %v706 = vsel %vm704, %v701, 0
        %708 = vmatprep.subr.mxu0 0.0
        %709 = vmatpush1.msra.mxu0 %v702
        %710 = vmatprep.subr.mxu0 0.0
        %711 = vmatpush1.msra.mxu0 %v703
        %712 = vmatprep.subr.mxu0 0.0
        %713 = vmatpush1.msra.mxu0 0.0
        %714 = vmatprep.subr.mxu0 0.0
        %715 = vmatpush1.msra.mxu0 0.0
        %716 = vmatprep.subr.mxu0 0.0
        %717 = vmatpush1.msra.mxu0 0.0
        %718 = vmatprep.subr.mxu0 0.0
        %719 = vmatpush1.msra.mxu0 0.0
        %720 = vmatprep.subr.mxu0 0.0
        %721 = vmatpush1.msra.mxu0 0.0
        %722 = vmatprep.subr.mxu0 0.0
        %723 = vmatpush1.msra.mxu0 0.0
        %724 = vmatprep.subr.mxu0 0.0
        %725 = vmatpush1.msra.mxu0 0.0
        %726 = vmatprep.subr.mxu0 0.0
        %727 = vmatpush1.msra.mxu0 0.0
        %728 = vmatprep.subr.mxu0 0.0
        %729 = vmatpush1.msra.mxu0 0.0
        %730 = vmatprep.subr.mxu0 0.0
        %731 = vmatpush1.msra.mxu0 0.0
        %732 = vmatprep.subr.mxu0 0.0
        %733 = vmatpush1.msra.mxu0 0.0
        %734 = vmatprep.subr.mxu0 0.0
        %735 = vmatpush1.msra.mxu0 0.0
        %736 = vmatprep.subr.mxu0 0.0
        %737 = vmatpush1.msra.mxu0 0.0
        %738 = vmatprep.subr.mxu0 0.0
        %739 = vmatpush1.msra.mxu0 0.0
        %740 = vmatprep.subr.mxu0 0.0
        %741 = vmatpush1.msra.mxu0 0.0
        %742 = vmatprep.subr.mxu0 0.0
        %743 = vmatpush1.msra.mxu0 0.0
        %744 = vmatprep.subr.mxu0 0.0
        %745 = vmatpush1.msra.mxu0 0.0
        %746 = vmatprep.subr.mxu0 0.0
        %747 = vmatpush1.msra.mxu0 0.0
        %748 = vmatprep.subr.mxu0 0.0
        %749 = vmatpush1.msra.mxu0 0.0
        %750 = vmatprep.subr.mxu0 0.0
        %751 = vmatpush1.msra.mxu0 0.0
        %752 = vmatprep.subr.mxu0 0.0
        %753 = vmatpush1.msra.mxu0 0.0
        %754 = vmatprep.subr.mxu0 0.0
        %755 = vmatpush1.msra.mxu0 0.0
        %756 = vmatprep.subr.mxu0 0.0
        %757 = vmatpush1.msra.mxu0 0.0
        %758 = vmatprep.subr.mxu0 0.0
        %759 = vmatpush1.msra.mxu0 0.0
        %760 = vmatprep.subr.mxu0 0.0
        %761 = vmatpush1.msra.mxu0 0.0
        %762 = vmatprep.subr.mxu0 0.0
        %763 = vmatpush1.msra.mxu0 0.0
        %764 = vmatprep.subr.mxu0 0.0
        %765 = vmatpush1.msra.mxu0 0.0
        %766 = vmatprep.subr.mxu0 0.0
        %767 = vmatpush1.msra.mxu0 0.0
        %768 = vmatprep.subr.mxu0 0.0
        %769 = vmatpush1.msra.mxu0 0.0
        %770 = vmatprep.subr.mxu0 0.0
        %771 = vmatpush1.msra.mxu0 0.0
        %772 = vmatprep.mubr.f32.mxu0 0.0
        %773 = vmatmul.mubr.f32.gmra.mrb[0].mxu0 %v706
        %v774 = vpop.f32.mrb[0].mxu0
        %v775 = vadd.f32 0.0, %v774
        %v776 = vpop.f32.mrb[0].mxu0
        %777 = vdwg.mxu0
        %v778 = vmul.f32 %v775, 0.25
        %v779 = vxor.u32 %v778, 2147483648
        %v780 = vmul.f32 %v779, 1.442695
        %v781 = vpow.pop %v780
        %v782 = vadd.f32 %v781, 1.0
        %v783 = vrcp.pop %v782
        %v784 = vmul.f32 1.0, %v783
        %v785 = vmul.f32 %v778, %v784
        %v786 = vld [vmem:[%s8] sm:$0xff]
        %v787 = vld [vmem:[%s8 + $0x8] sm:$0xff]
        %v788 = vld [vmem:[%s8 + $0x10] sm:$0xff]
        %v789 = vld [vmem:[%s8 + $0x18] sm:$0xff]
        %vm790 = vcmask 261120
        %v792 = vsel %vm790, %v785, 0
        %794 = vmatprep.subr.mxu0 0.0
        %795 = vmatpush1.msra.mxu0 %v786
        %796 = vmatprep.subr.mxu0 0.0
        %797 = vmatpush1.msra.mxu0 %v787
        %798 = vmatprep.subr.mxu0 0.0
        %799 = vmatpush1.msra.mxu0 %v788
        %800 = vmatprep.subr.mxu0 0.0
        %801 = vmatpush1.msra.mxu0 %v789
        %802 = vmatprep.subr.mxu0 0.0
        %803 = vmatpush1.msra.mxu0 0.0
        %804 = vmatprep.subr.mxu0 0.0
        %805 = vmatpush1.msra.mxu0 0.0
        %806 = vmatprep.subr.mxu0 0.0
        %807 = vmatpush1.msra.mxu0 0.0
        %808 = vmatprep.subr.mxu0 0.0
        %809 = vmatpush1.msra.mxu0 0.0
        %810 = vmatprep.subr.mxu0 0.0
        %811 = vmatpush1.msra.mxu0 0.0
        %812 = vmatprep.subr.mxu0 0.0
        %813 = vmatpush1.msra.mxu0 0.0
        %814 = vmatprep.subr.mxu0 0.0
        %815 = vmatpush1.msra.mxu0 0.0
        %816 = vmatprep.subr.mxu0 0.0
        %817 = vmatpush1.msra.mxu0 0.0
        %818 = vmatprep.subr.mxu0 0.0
        %819 = vmatpush1.msra.mxu0 0.0
        %820 = vmatprep.subr.mxu0 0.0
        %821 = vmatpush1.msra.mxu0 0.0
        %822 = vmatprep.subr.mxu0 0.0
        %823 = vmatpush1.msra.mxu0 0.0
        %824 = vmatprep.subr.mxu0 0.0
        %825 = vmatpush1.msra.mxu0 0.0
        %826 = vmatprep.subr.mxu0 0.0
        %827 = vmatpush1.msra.mxu0 0.0
        %828 = vmatprep.subr.mxu0 0.0
        %829 = vmatpush1.msra.mxu0 0.0
        %830 = vmatprep.subr.mxu0 0.0
        %831 = vmatpush1.msra.mxu0 0.0
        %832 = vmatprep.subr.mxu0 0.0
        %833 = vmatpush1.msra.mxu0 0.0
        %834 = vmatprep.subr.mxu0 0.0
        %835 = vmatpush1.msra.mxu0 0.0
        %836 = vmatprep.subr.mxu0 0.0
        %837 = vmatpush1.msra.mxu0 0.0
        %838 = vmatprep.subr.mxu0 0.0
        %839 = vmatpush1.msra.mxu0 0.0
        %840 = vmatprep.subr.mxu0 0.0
        %841 = vmatpush1.msra.mxu0 0.0
        %842 = vmatprep.subr.mxu0 0.0
        %843 = vmatpush1.msra.mxu0 0.0
        %844 = vmatprep.subr.mxu0 0.0
        %845 = vmatpush1.msra.mxu0 0.0
        %846 = vmatprep.subr.mxu0 0.0
        %847 = vmatpush1.msra.mxu0 0.0
        %848 = vmatprep.subr.mxu0 0.0
        %849 = vmatpush1.msra.mxu0 0.0
        %850 = vmatprep.subr.mxu0 0.0
        %851 = vmatpush1.msra.mxu0 0.0
        %852 = vmatprep.subr.mxu0 0.0
        %853 = vmatpush1.msra.mxu0 0.0
        %854 = vmatprep.subr.mxu0 0.0
        %855 = vmatpush1.msra.mxu0 0.0
        %856 = vmatprep.subr.mxu0 0.0
        %857 = vmatpush1.msra.mxu0 0.0
        %858 = vmatprep.mubr.f32.mxu0 0.0
        %859 = vmatmul.mubr.f32.gmra.mrb[0].mxu0 %v792
        %v860 = vpop.f32.mrb[0].mxu0
        %v861 = vadd.f32 0.0, %v860
        %v862 = vpop.f32.mrb[0].mxu0
        %863 = vdwg.mxu0
        %v864 = vmul.f32 %v861, 0.17677669
        %v865 = vld [vmem:[%s448] sm:$0xff]
        %v866 = vld [vmem:[%s13] sm:$0xf]
        %vm867 = vcmask 31744
        %v869 = vsel %vm867, %v865, 0
        %vm871 = vcmask 1043456
        %v873 = vsel %vm871, %v866, 0
        %875 = vmatprep.subr.mxu0 0.0
        %876 = vmatpush1.msra.mxu0 %v873
        %877 = vmatprep.subr.mxu0 0.0
        %878 = vmatpush1.msra.mxu0 0.0
        %879 = vmatprep.subr.mxu0 0.0
        %880 = vmatpush1.msra.mxu0 0.0
        %881 = vmatprep.subr.mxu0 0.0
        %882 = vmatpush1.msra.mxu0 0.0
        %883 = vmatprep.subr.mxu0 0.0
        %884 = vmatpush1.msra.mxu0 0.0
        %885 = vmatprep.subr.mxu0 0.0
        %886 = vmatpush1.msra.mxu0 0.0
        %887 = vmatprep.subr.mxu0 0.0
        %888 = vmatpush1.msra.mxu0 0.0
        %889 = vmatprep.subr.mxu0 0.0
        %890 = vmatpush1.msra.mxu0 0.0
        %891 = vmatprep.subr.mxu0 0.0
        %892 = vmatpush1.msra.mxu0 0.0
        %893 = vmatprep.subr.mxu0 0.0
        %894 = vmatpush1.msra.mxu0 0.0
        %895 = vmatprep.subr.mxu0 0.0
        %896 = vmatpush1.msra.mxu0 0.0
        %897 = vmatprep.subr.mxu0 0.0
        %898 = vmatpush1.msra.mxu0 0.0
        %899 = vmatprep.subr.mxu0 0.0
        %900 = vmatpush1.msra.mxu0 0.0
        %901 = vmatprep.subr.mxu0 0.0
        %902 = vmatpush1.msra.mxu0 0.0
        %903 = vmatprep.subr.mxu0 0.0
        %904 = vmatpush1.msra.mxu0 0.0
        %905 = vmatprep.subr.mxu0 0.0
        %906 = vmatpush1.msra.mxu0 0.0
        %907 = vmatprep.subr.mxu0 0.0
        %908 = vmatpush1.msra.mxu0 0.0
        %909 = vmatprep.subr.mxu0 0.0
        %910 = vmatpush1.msra.mxu0 0.0
        %911 = vmatprep.subr.mxu0 0.0
        %912 = vmatpush1.msra.mxu0 0.0
        %913 = vmatprep.subr.mxu0 0.0
        %914 = vmatpush1.msra.mxu0 0.0
        %915 = vmatprep.subr.mxu0 0.0
        %916 = vmatpush1.msra.mxu0 0.0
        %917 = vmatprep.subr.mxu0 0.0
        %918 = vmatpush1.msra.mxu0 0.0
        %919 = vmatprep.subr.mxu0 0.0
        %920 = vmatpush1.msra.mxu0 0.0
        %921 = vmatprep.subr.mxu0 0.0
        %922 = vmatpush1.msra.mxu0 0.0
        %923 = vmatprep.subr.mxu0 0.0
        %924 = vmatpush1.msra.mxu0 0.0
        %925 = vmatprep.subr.mxu0 0.0
        %926 = vmatpush1.msra.mxu0 0.0
        %927 = vmatprep.subr.mxu0 0.0
        %928 = vmatpush1.msra.mxu0 0.0
        %929 = vmatprep.subr.mxu0 0.0
        %930 = vmatpush1.msra.mxu0 0.0
        %931 = vmatprep.subr.mxu0 0.0
        %932 = vmatpush1.msra.mxu0 0.0
        %933 = vmatprep.subr.mxu0 0.0
        %934 = vmatpush1.msra.mxu0 0.0
        %935 = vmatprep.subr.mxu0 0.0
        %936 = vmatpush1.msra.mxu0 0.0
        %937 = vmatprep.subr.mxu0 0.0
        %938 = vmatpush1.msra.mxu0 0.0
        %939 = vmatprep.mubr.f32.mxu0 0.0
        %940 = vmatmul.mubr.f32.gmra.mrb[0].mxu0 %v869
        %v941 = vpop.f32.mrb[0].mxu0
        %v942 = vadd.f32 0.0, %v941
        %v943 = vpop.f32.mrb[0].mxu0
        %944 = vdwg.mxu0
        %v945 = vmul.f32 %v864, %v942
        %v946 = vld [vmem:[%s14] sm:$0xff]
        %v947 = vld [vmem:[%s14 + $0x8] sm:$0xff]
        %v948 = vld [vmem:[%s14 + $0x10] sm:$0xff]
        %v949 = vld [vmem:[%s14 + $0x18] sm:$0xff]
        %v951 = vsel %vm790, %v945, 0
        %953 = vmatprep.subr.mxu0 0.0
        %954 = vmatpush1.msra.mxu0 %v946
        %955 = vmatprep.subr.mxu0 0.0
        %956 = vmatpush1.msra.mxu0 %v947
        %957 = vmatprep.subr.mxu0 0.0
        %958 = vmatpush1.msra.mxu0 %v948
        %959 = vmatprep.subr.mxu0 0.0
        %960 = vmatpush1.msra.mxu0 %v949
        %961 = vmatprep.subr.mxu0 0.0
        %962 = vmatpush1.msra.mxu0 0.0
        %963 = vmatprep.subr.mxu0 0.0
        %964 = vmatpush1.msra.mxu0 0.0
        %965 = vmatprep.subr.mxu0 0.0
        %966 = vmatpush1.msra.mxu0 0.0
        %967 = vmatprep.subr.mxu0 0.0
        %968 = vmatpush1.msra.mxu0 0.0
        %969 = vmatprep.subr.mxu0 0.0
        %970 = vmatpush1.msra.mxu0 0.0
        %971 = vmatprep.subr.mxu0 0.0
        %972 = vmatpush1.msra.mxu0 0.0
        %973 = vmatprep.subr.mxu0 0.0
        %974 = vmatpush1.msra.mxu0 0.0
        %975 = vmatprep.subr.mxu0 0.0
        %976 = vmatpush1.msra.mxu0 0.0
        %977 = vmatprep.subr.mxu0 0.0
        %978 = vmatpush1.msra.mxu0 0.0
        %979 = vmatprep.subr.mxu0 0.0
        %980 = vmatpush1.msra.mxu0 0.0
        %981 = vmatprep.subr.mxu0 0.0
        %982 = vmatpush1.msra.mxu0 0.0
        %983 = vmatprep.subr.mxu0 0.0
        %984 = vmatpush1.msra.mxu0 0.0
        %985 = vmatprep.subr.mxu0 0.0
        %986 = vmatpush1.msra.mxu0 0.0
        %987 = vmatprep.subr.mxu0 0.0
        %988 = vmatpush1.msra.mxu0 0.0
        %989 = vmatprep.subr.mxu0 0.0
        %990 = vmatpush1.msra.mxu0 0.0
        %991 = vmatprep.subr.mxu0 0.0
        %992 = vmatpush1.msra.mxu0 0.0
        %993 = vmatprep.subr.mxu0 0.0
        %994 = vmatpush1.msra.mxu0 0.0
        %995 = vmatprep.subr.mxu0 0.0
        %996 = vmatpush1.msra.mxu0 0.0
        %997 = vmatprep.subr.mxu0 0.0
        %998 = vmatpush1.msra.mxu0 0.0
        %999 = vmatprep.subr.mxu0 0.0
        %1000 = vmatpush1.msra.mxu0 0.0
        %1001 = vmatprep.subr.mxu0 0.0
        %1002 = vmatpush1.msra.mxu0 0.0
        %1003 = vmatprep.subr.mxu0 0.0
        %1004 = vmatpush1.msra.mxu0 0.0
        %1005 = vmatprep.subr.mxu0 0.0
        %1006 = vmatpush1.msra.mxu0 0.0
        %1007 = vmatprep.subr.mxu0 0.0
        %1008 = vmatpush1.msra.mxu0 0.0
        %1009 = vmatprep.subr.mxu0 0.0
        %1010 = vmatpush1.msra.mxu0 0.0
        %1011 = vmatprep.subr.mxu0 0.0
        %1012 = vmatpush1.msra.mxu0 0.0
        %1013 = vmatprep.subr.mxu0 0.0
        %1014 = vmatpush1.msra.mxu0 0.0
        %1015 = vmatprep.subr.mxu0 0.0
        %1016 = vmatpush1.msra.mxu0 0.0
        %1017 = vmatprep.mubr.f32.mxu0 0.0
        %1018 = vmatmul.mubr.f32.gmra.mrb[0].mxu0 %v951
        %v1019 = vpop.f32.mrb[0].mxu0
        %v1020 = vadd.f32 0.0, %v1019
        %v1021 = vpop.f32.mrb[0].mxu0
        %1022 = vdwg.mxu0
        %v1023 = vmul.f32 %v1020, 0.5
        %vm1024 = vcmask 64512
        %1025 = vst.msk [vmem:[#allocation6] sm:$0xff] %vm1024, %v1023
        %s1026 = smul.u32 %s37, 8
        loop: start=0, step=1, limit=8
        $region77: #{tpu_custom_call.1} parent=71 // loop_pre_header
          _
        $region78: #{tpu_custom_call.1} parent=71 // loop_header
          %s1028 = sphi 0, %s1032
          %p1029 = scmp.ge.s32.totalorder %s1028, 8
        $region79: #{tpu_custom_call.1} parent=71 // loop_header_branch
          %1031 = sbr.rel (%p1029) target = $region83
        $region80: #{tpu_custom_call.1} parent=71 // loop_body
          %s1033 = sadd.s32 %s1026, %s1028
          %s1034 = sld [smem:[#allocation8 + %s1033]]
          %s1035 = sld [smem:[#allocation9 + %s1033]]
          %s1036 = scalar_lea.vmem [#allocation3], %s1034
          %v1037 = vld [vmem:[%s1036] sm:$0x1]
          %s1038 = scalar_lea.vmem [#allocation6], %s1028
          %v1039 = vld [vmem:[%s1038] sm:$0x1]
          %v1040 = vmul.f32 %v1037, %v1039
          %s1041 = scalar_lea.vmem [#allocation5], %s1035
          %v1042 = vld [vmem:[%s1041] sm:$0x1]
          %v1043 = vadd.f32 %v1042, %v1040
          %vm1044 = vcmask 57344
          %1045 = vst.msk [vmem:[%s1041] sm:$0x1] %vm1044, %v1043
        $region81: #{tpu_custom_call.1} parent=71 // loop_footer
          %s1032 = sadd.s32 1, %s1028
        $region82: #{tpu_custom_call.1} parent=71 // loop_footer_branch
          %1027 = sbr.rel target = $region78
        $region83: #{tpu_custom_call.1} parent=71 // loop_exit
          _
        %p1046 = scmp.eq.s32.totalorder %s37, 1
        // Predicated region
        $region84: #{tpu_custom_call.1} parent=71 // pred_check
          %p1047 = pneg %p1046
        $region85: #{tpu_custom_call.1} parent=71 // pred_check_branch
          %1049 = sbr.rel (%p1047) target = $region87
        $region86: #{tpu_custom_call.1} parent=71 // pred_region
          %v1050 = vld [vmem:[#allocation5] sm:$0xff]
          %v1051 = vmul.f32 %v1050, 0.57735026
          %v1052 = vld [vmem:[%s11] sm:$0xff]
          %v1054 = vsel %vm1024, %v1051, 0
          %1056 = vmatprep.subr.mxu0 0.0
          %1057 = vmatpush1.msra.mxu0 %v1052
          %1058 = vmatprep.subr.mxu0 0.0
          %1059 = vmatpush1.msra.mxu0 0.0
          %1060 = vmatprep.subr.mxu0 0.0
          %1061 = vmatpush1.msra.mxu0 0.0
          %1062 = vmatprep.subr.mxu0 0.0
          %1063 = vmatpush1.msra.mxu0 0.0
          %1064 = vmatprep.subr.mxu0 0.0
          %1065 = vmatpush1.msra.mxu0 0.0
          %1066 = vmatprep.subr.mxu0 0.0
          %1067 = vmatpush1.msra.mxu0 0.0
          %1068 = vmatprep.subr.mxu0 0.0
          %1069 = vmatpush1.msra.mxu0 0.0
          %1070 = vmatprep.subr.mxu0 0.0
          %1071 = vmatpush1.msra.mxu0 0.0
          %1072 = vmatprep.subr.mxu0 0.0
          %1073 = vmatpush1.msra.mxu0 0.0
          %1074 = vmatprep.subr.mxu0 0.0
          %1075 = vmatpush1.msra.mxu0 0.0
          %1076 = vmatprep.subr.mxu0 0.0
          %1077 = vmatpush1.msra.mxu0 0.0
          %1078 = vmatprep.subr.mxu0 0.0
          %1079 = vmatpush1.msra.mxu0 0.0
          %1080 = vmatprep.subr.mxu0 0.0
          %1081 = vmatpush1.msra.mxu0 0.0
          %1082 = vmatprep.subr.mxu0 0.0
          %1083 = vmatpush1.msra.mxu0 0.0
          %1084 = vmatprep.subr.mxu0 0.0
          %1085 = vmatpush1.msra.mxu0 0.0
          %1086 = vmatprep.subr.mxu0 0.0
          %1087 = vmatpush1.msra.mxu0 0.0
          %1088 = vmatprep.subr.mxu0 0.0
          %1089 = vmatpush1.msra.mxu0 0.0
          %1090 = vmatprep.subr.mxu0 0.0
          %1091 = vmatpush1.msra.mxu0 0.0
          %1092 = vmatprep.subr.mxu0 0.0
          %1093 = vmatpush1.msra.mxu0 0.0
          %1094 = vmatprep.subr.mxu0 0.0
          %1095 = vmatpush1.msra.mxu0 0.0
          %1096 = vmatprep.subr.mxu0 0.0
          %1097 = vmatpush1.msra.mxu0 0.0
          %1098 = vmatprep.subr.mxu0 0.0
          %1099 = vmatpush1.msra.mxu0 0.0
          %1100 = vmatprep.subr.mxu0 0.0
          %1101 = vmatpush1.msra.mxu0 0.0
          %1102 = vmatprep.subr.mxu0 0.0
          %1103 = vmatpush1.msra.mxu0 0.0
          %1104 = vmatprep.subr.mxu0 0.0
          %1105 = vmatpush1.msra.mxu0 0.0
          %1106 = vmatprep.subr.mxu0 0.0
          %1107 = vmatpush1.msra.mxu0 0.0
          %1108 = vmatprep.subr.mxu0 0.0
          %1109 = vmatpush1.msra.mxu0 0.0
          %1110 = vmatprep.subr.mxu0 0.0
          %1111 = vmatpush1.msra.mxu0 0.0
          %1112 = vmatprep.subr.mxu0 0.0
          %1113 = vmatpush1.msra.mxu0 0.0
          %1114 = vmatprep.subr.mxu0 0.0
          %1115 = vmatpush1.msra.mxu0 0.0
          %1116 = vmatprep.subr.mxu0 0.0
          %1117 = vmatpush1.msra.mxu0 0.0
          %1118 = vmatprep.subr.mxu0 0.0
          %1119 = vmatpush1.msra.mxu0 0.0
          %1120 = vmatprep.mubr.f32.mxu0 0.0
          %1121 = vmatmul.mubr.f32.gmra.mrb[0].mxu0 %v1054
          %v1122 = vpop.f32.mrb[0].mxu0
          %v1123 = vadd.f32 0.0, %v1122
          %v1124 = vpop.f32.mrb[0].mxu0
          %1125 = vdwg.mxu0
          %v1126 = vld [vmem:[#allocation4] sm:$0xff]
          %v1127 = vmul.f32 %v1123, %v1126
          %v1128 = vld [vmem:[%s10] sm:$0xff]
          %v1129 = vld [vmem:[%s10 + $0x8] sm:$0xff]
          %v1130 = vld [vmem:[%s10 + $0x10] sm:$0xff]
          %v1131 = vld [vmem:[%s10 + $0x18] sm:$0xff]
          %v1133 = vsel %vm790, %v1127, 0
          %1135 = vmatprep.subr.mxu0 0.0
          %1136 = vmatpush1.msra.mxu0 %v1128
          %1137 = vmatprep.subr.mxu0 0.0
          %1138 = vmatpush1.msra.mxu0 %v1129
          %1139 = vmatprep.subr.mxu0 0.0
          %1140 = vmatpush1.msra.mxu0 %v1130
          %1141 = vmatprep.subr.mxu0 0.0
          %1142 = vmatpush1.msra.mxu0 %v1131
          %1143 = vmatprep.subr.mxu0 0.0
          %1144 = vmatpush1.msra.mxu0 0.0
          %1145 = vmatprep.subr.mxu0 0.0
          %1146 = vmatpush1.msra.mxu0 0.0
          %1147 = vmatprep.subr.mxu0 0.0
          %1148 = vmatpush1.msra.mxu0 0.0
          %1149 = vmatprep.subr.mxu0 0.0
          %1150 = vmatpush1.msra.mxu0 0.0
          %1151 = vmatprep.subr.mxu0 0.0
          %1152 = vmatpush1.msra.mxu0 0.0
          %1153 = vmatprep.subr.mxu0 0.0
          %1154 = vmatpush1.msra.mxu0 0.0
          %1155 = vmatprep.subr.mxu0 0.0
          %1156 = vmatpush1.msra.mxu0 0.0
          %1157 = vmatprep.subr.mxu0 0.0
          %1158 = vmatpush1.msra.mxu0 0.0
          %1159 = vmatprep.subr.mxu0 0.0
          %1160 = vmatpush1.msra.mxu0 0.0
          %1161 = vmatprep.subr.mxu0 0.0
          %1162 = vmatpush1.msra.mxu0 0.0
          %1163 = vmatprep.subr.mxu0 0.0
          %1164 = vmatpush1.msra.mxu0 0.0
          %1165 = vmatprep.subr.mxu0 0.0
          %1166 = vmatpush1.msra.mxu0 0.0
          %1167 = vmatprep.subr.mxu0 0.0
          %1168 = vmatpush1.msra.mxu0 0.0
          %1169 = vmatprep.subr.mxu0 0.0
          %1170 = vmatpush1.msra.mxu0 0.0
          %1171 = vmatprep.subr.mxu0 0.0
          %1172 = vmatpush1.msra.mxu0 0.0
          %1173 = vmatprep.subr.mxu0 0.0
          %1174 = vmatpush1.msra.mxu0 0.0
          %1175 = vmatprep.subr.mxu0 0.0
          %1176 = vmatpush1.msra.mxu0 0.0
          %1177 = vmatprep.subr.mxu0 0.0
          %1178 = vmatpush1.msra.mxu0 0.0
          %1179 = vmatprep.subr.mxu0 0.0
          %1180 = vmatpush1.msra.mxu0 0.0
          %1181 = vmatprep.subr.mxu0 0.0
          %1182 = vmatpush1.msra.mxu0 0.0
          %1183 = vmatprep.subr.mxu0 0.0
          %1184 = vmatpush1.msra.mxu0 0.0
          %1185 = vmatprep.subr.mxu0 0.0
          %1186 = vmatpush1.msra.mxu0 0.0
          %1187 = vmatprep.subr.mxu0 0.0
          %1188 = vmatpush1.msra.mxu0 0.0
          %1189 = vmatprep.subr.mxu0 0.0
          %1190 = vmatpush1.msra.mxu0 0.0
          %1191 = vmatprep.subr.mxu0 0.0
          %1192 = vmatpush1.msra.mxu0 0.0
          %1193 = vmatprep.subr.mxu0 0.0
          %1194 = vmatpush1.msra.mxu0 0.0
          %1195 = vmatprep.subr.mxu0 0.0
          %1196 = vmatpush1.msra.mxu0 0.0
          %1197 = vmatprep.subr.mxu0 0.0
          %1198 = vmatpush1.msra.mxu0 0.0
          %1199 = vmatprep.mubr.f32.mxu0 0.0
          %1200 = vmatmul.mubr.f32.gmra.mrb[0].mxu0 %v1133
          %v1201 = vpop.f32.mrb[0].mxu0
          %v1202 = vadd.f32 0.0, %v1201
          %v1203 = vpop.f32.mrb[0].mxu0
          %1204 = vdwg.mxu0
          %v1205 = vmul.f32 %v1202, 0.17677669
          %v1206 = vld [vmem:[%s4] sm:$0x1]
          %v1207 = vld [vmem:[#allocation2] sm:$0xff]
          %v1208 = vmul.f32 %v1207, 0.38268343
          %v1209 = vsub.f32 1.0, %v1206
          %v1210 = vmul.f32 %v1206, 0.9238795
          %v1211 = vadd.f32 %v1209, %v1210
          %v1213 = vlaneseq
          %v1214 = vshrl.u32 %v1213, 7
          %v1215 = vsub.s32 0, %v1214
          %v1216 = vrot.slane %v1211, %v1215
          %v1218 = vmul.f32 %v1216, %v1205
          %v1219 = vadd.f32 %v1208, %v1218
          %1220 = vst.msk [vmem:[#allocation10] sm:$0xff] %vm1024, %v1219
        $region87: #{tpu_custom_call.1} parent=71 // pred_fallthru
          _
        // Predicated region
        $region88: #{tpu_custom_call.1} parent=71 // pred_check
          %p1221 = pneg %p333
        $region89: #{tpu_custom_call.1} parent=71 // pred_check_branch
          %1223 = sbr.rel (%p1221) target = $region91
        $region90: #{tpu_custom_call.1} parent=71 // pred_region
          %s1225 = ssub.s32 128, 128
          %1226 = vsyncadd [#allocation11], %s1225
          %s1228 = sshll.u32 [#allocation10], 4
          %s1229 = int_to_ptr.vmem [resolvable:$true] %s1228
          %1231 = dma.vmem_to_hbm [thread:$0]  %s1229, 128, %s15, [#allocation11]
        $region91: #{tpu_custom_call.1} parent=71 // pred_fallthru
          _
        // Predicated region
        $region92: #{tpu_custom_call.1} parent=71 // pred_check
          %p1232 = pneg %p333
        $region93: #{tpu_custom_call.1} parent=71 // pred_check_branch
          %1234 = sbr.rel (%p1232) target = $region95
        $region94: #{tpu_custom_call.1} parent=71 // pred_region
          %1235 = dma.done [#allocation11], 128
        $region95: #{tpu_custom_call.1} parent=71 // pred_fallthru
          _
      $region72: #{tpu_custom_call.1} parent=5 // pred_fallthru
        _
      %p1236 = scmp.le.s32.totalorder 2, %s32
      // Predicated region
      $region96: #{tpu_custom_call.1} parent=5 // pred_check
        %p1237 = pneg %p1236
      $region97: #{tpu_custom_call.1} parent=5 // pred_check_branch
        %1239 = sbr.rel (%p1237) target = $region99
      $region98: #{tpu_custom_call.1} parent=5 // pred_region
        %s1240 = ssub.s32 %s32, 2
      $region99: #{tpu_custom_call.1} parent=5 // pred_fallthru
        _
    $region6: #{tpu_custom_call.1} parent=1 // loop_footer
      %s36 = sadd.s32 1, %s32
    $region7: #{tpu_custom_call.1} parent=1 // loop_footer_branch
      %31 = sbr.rel target = $region3
    $region8: #{tpu_custom_call.1} parent=1 // loop_exit
      _
    %1241 = vsyncpa [#allocation11], 1
    %s1242 = scalar_lea.sflag [#allocation11], 1
    %1243 = vsyncpa %s1242, 1

</llo_original>
